<compile_context>
chip_gen: v6e
topology: v6e:2x2x1
jax: 0.10.0
libtpu: 0.0.40
codegen_flags: <defaults>
</compile_context>

<pallas_src>
import math

import jax
import jax.numpy as jnp
from jax import lax
from jax.experimental import pallas as pl
from jax.experimental.pallas import tpu as pltpu

# Small, deterministic problem size (consistent with an HF attention forward).
B, S, H = 2, 8, 32          # batch, seq, hidden
NH, D = 4, 8                # num heads, head dim (NH * D == H)


# ----------------------------- Pallas kernel -------------------------------- #

def _fused_mha_kernel(x_ref, wqkv_ref, wo_ref, o_ref, attn_ref):
    """Fully fused causal MHA forward for one tiny [B*S, H] problem.

    x_ref:    [B*S, H]      input hidden states
    wqkv_ref: [3H, H]       concatenated q/k/v nn.Linear weights ([out, in])
    wo_ref:   [H, H]        output projection weight ([out, in])
    o_ref:    [B*S, H]      final attention-layer output
    attn_ref: [B*S, H] f32  VMEM scratch: merged per-head attention outputs
    """
    x = x_ref[...]

    # Fused QKV projection: x @ wqkv.T with the transpose folded into the
    # contraction (no materialized weight transpose, single MXU push chain).
    qkv = lax.dot_general(
        x, wqkv_ref[...],
        dimension_numbers=(((1,), (1,)), ((), ())),
        preferred_element_type=jnp.float32)                        # [B*S, 3H]

    scale = 1.0 / math.sqrt(D)

    # Causal mask hoisted: built once, reused by every (batch, head) pair.
    rows = lax.broadcasted_iota(jnp.int32, (S, S), 0)
    cols = lax.broadcasted_iota(jnp.int32, (S, S), 1)
    causal = cols <= rows

    # Unrolled per-(batch, head) attention.  Everything is a static 2-D slice,
    # so there is no per-head grid-step overhead and no HBM round trip.
    for b in range(B):
        r0 = b * S
        for h in range(NH):
            cq = h * D
            q = qkv[r0:r0 + S, cq:cq + D]                          # [S, D]
            k = qkv[r0:r0 + S, H + cq:H + cq + D]                  # [S, D]
            v = qkv[r0:r0 + S, 2 * H + cq:2 * H + cq + D]          # [S, D]

            # q @ k.T via dot_general (contraction on last axes; no XLU .T).
            s = lax.dot_general(
                q, k, dimension_numbers=(((1,), (1,)), ((), ())),
                preferred_element_type=jnp.float32) * scale        # [S, S]
            s = jnp.where(causal, s, -jnp.inf)

            # Numerically stable softmax (diagonal is never masked -> l > 0).
            m = jnp.max(s, axis=-1, keepdims=True)
            p = jnp.exp(s - m)
            l = jnp.sum(p, axis=-1, keepdims=True)

            o = jnp.dot(p, v, preferred_element_type=jnp.float32)  # [S, D]
            attn_ref[r0:r0 + S, cq:cq + D] = o * (1.0 / l)

    # Output projection: attn @ wo.T (transpose folded into the contraction).
    out = lax.dot_general(
        attn_ref[...], wo_ref[...],
        dimension_numbers=(((1,), (1,)), ((), ())),
        preferred_element_type=jnp.float32)                        # [B*S, H]
    o_ref[...] = out.astype(o_ref.dtype)


# ------------------------------ JAX wrapper --------------------------------- #

@jax.jit
def hf_wrapper_forward(x, wq, wk, wv, wo):
    """Equivalent of HFWrapper(model).forward(x) -> model(x)[0]."""
    x2d = x.reshape(B * S, H)
    wqkv = jnp.concatenate([wq, wk, wv], axis=0)                   # [3H, H]

    out = pl.pallas_call(
        _fused_mha_kernel,
        out_shape=jax.ShapeDtypeStruct((B * S, H), x.dtype),
        grid_spec=pltpu.PrefetchScalarGridSpec(
            num_scalar_prefetch=0,
            grid=(1,),
            in_specs=[
                pl.BlockSpec((B * S, H), lambda i: (0, 0)),
                pl.BlockSpec((3 * H, H), lambda i: (0, 0)),
                pl.BlockSpec((H, H), lambda i: (0, 0)),
            ],
            out_specs=pl.BlockSpec((B * S, H), lambda i: (0, 0)),
            scratch_shapes=[pltpu.VMEM((B * S, H), jnp.float32)],
        ),
    )(x2d, wqkv, wo)
    return out.reshape(B, S, H)


def reference_forward(x, wq, wk, wv, wo):
    """Pure-JAX reference (mirrors HF causal MHA, returns attn_output)."""
    q = x @ wq.T
    k = x @ wk.T
    v = x @ wv.T

    def to_heads(t):
        return t.reshape(B, S, NH, D).transpose(0, 2, 1, 3)  # [B, NH, S, D]

    qh, kh, vh = to_heads(q), to_heads(k), to_heads(v)
    s = jnp.einsum("bhqd,bhkd->bhqk", qh, kh) / math.sqrt(D)
    mask = jnp.tril(jnp.ones((S, S), dtype=bool))
    s = jnp.where(mask, s, -jnp.inf)
    p = jax.nn.softmax(s, axis=-1)
    o = jnp.einsum("bhqk,bhkd->bhqd", p, vh)
    o = o.transpose(0, 2, 1, 3).reshape(B, S, H)
    return o @ wo.T


# --------------------------------- main ------------------------------------- #

if __name__ == "__main__":
    key = jax.random.PRNGKey(0)
    kx, kq, kk, kv, ko = jax.random.split(key, 5)

    x = jax.random.normal(kx, (B, S, H), dtype=jnp.float32)
    # HF nn.Linear weights: shape [out_features, in_features]
    scale = 1.0 / math.sqrt(H)
    wq = jax.random.normal(kq, (H, H), dtype=jnp.float32) * scale
    wk = jax.random.normal(kk, (H, H), dtype=jnp.float32) * scale
    wv = jax.random.normal(kv, (H, H), dtype=jnp.float32) * scale
    wo = jax.random.normal(ko, (H, H), dtype=jnp.float32) * scale

    out = hf_wrapper_forward(x, wq, wk, wv, wo)
    out = jax.block_until_ready(out)

    ref = reference_forward(x, wq, wk, wv, wo)
    assert out.shape == (B, S, H)
    assert jnp.allclose(out, ref, atol=1e-4, rtol=1e-4), "mismatch vs reference"

    print("KERNEL_OK")
</pallas_src>

<mosaic_0001>
module attributes {stable_mosaic.version = 11 : i64} {
  func.func @_fused_mha_kernel(%arg0: i32, %arg1: memref<16x32xf32, #tpu.memory_space<vmem>>, %arg2: memref<96x32xf32, #tpu.memory_space<vmem>>, %arg3: memref<32x32xf32, #tpu.memory_space<vmem>>, %arg4: memref<16x32xf32, #tpu.memory_space<vmem>>, %arg5: memref<16x32xf32, #tpu.memory_space<vmem>>) attributes {dimension_semantics = [#tpu.dimension_semantics<arbitrary>], iteration_bounds = array<i64: 1>, scalar_prefetch = 0 : i64, scratch_operands = 1 : i64, tpu.core_type = #tpu.core_type<tc>, window_params = [{pipeline_mode = #tpu.pipeline_mode<synchronous>, transform_indices = @transform_0, window_bounds = array<i64: 16, 32>}, {pipeline_mode = #tpu.pipeline_mode<synchronous>, transform_indices = @transform_1, window_bounds = array<i64: 96, 32>}, {pipeline_mode = #tpu.pipeline_mode<synchronous>, transform_indices = @transform_2, window_bounds = array<i64: 32, 32>}, {pipeline_mode = #tpu.pipeline_mode<synchronous>, transform_indices = @transform_3, window_bounds = array<i64: 16, 32>}]} {
    %c0 = arith.constant 0 : index
    %c0_0 = arith.constant 0 : index
    %0 = vector.load %arg1[%c0, %c0_0] : memref<16x32xf32, #tpu.memory_space<vmem>>, vector<16x32xf32>
    %c0_1 = arith.constant 0 : index
    %c0_2 = arith.constant 0 : index
    %1 = vector.load %arg2[%c0_1, %c0_2] : memref<96x32xf32, #tpu.memory_space<vmem>>, vector<96x32xf32>
    %cst = arith.constant dense<0.000000e+00> : vector<16x96xf32>
    %2 = tpu.matmul %0, %1, %cst {dimension_numbers = #tpu.dot_dimension_numbers<[1], [1], [0], [0], [0, 0, 1, 0], [], []>} : vector<16x32xf32>, vector<96x32xf32>, vector<16x96xf32> -> vector<16x96xf32>
    %3 = tpu.iota {dimensions = array<i32: 0>} : vector<8x8xi32>
    %4 = tpu.iota {dimensions = array<i32: 1>} : vector<8x8xi32>
    %5 = arith.cmpi sle, %4, %3 : vector<8x8xi32>
    %6 = vector.extract_strided_slice %2 {offsets = [0, 0], sizes = [8, 8], strides = [1, 1]} : vector<16x96xf32> to vector<8x8xf32>
    %7 = vector.extract_strided_slice %2 {offsets = [0, 32], sizes = [8, 8], strides = [1, 1]} : vector<16x96xf32> to vector<8x8xf32>
    %8 = vector.extract_strided_slice %2 {offsets = [0, 64], sizes = [8, 8], strides = [1, 1]} : vector<16x96xf32> to vector<8x8xf32>
    %cst_3 = arith.constant dense<0.000000e+00> : vector<8x8xf32>
    %9 = tpu.matmul %6, %7, %cst_3 {dimension_numbers = #tpu.dot_dimension_numbers<[1], [1], [0], [0], [0, 0, 1, 0], [], []>} : vector<8x8xf32>, vector<8x8xf32>, vector<8x8xf32> -> vector<8x8xf32>
    %cst_4 = arith.constant 0.353553385 : f32
    %10 = vector.broadcast %cst_4 : f32 to vector<8x8xf32>
    %11 = arith.mulf %9, %10 : vector<8x8xf32>
    %cst_5 = arith.constant 0xFF800000 : f32
    %12 = vector.broadcast %cst_5 : f32 to vector<8x8xf32>
    %13 = arith.select %5, %11, %12 : vector<8x8xi1>, vector<8x8xf32>
    %cst_6 = arith.constant dense<0xFF800000> : vector<8xf32>
    %14 = vector.multi_reduction <maximumf>, %13, %cst_6 [1] : vector<8x8xf32> to vector<8xf32>
    %15 = vector.shape_cast %14 : vector<8xf32> to vector<8x1xf32>
    %16 = vector.broadcast %15 : vector<8x1xf32> to vector<8x8xf32>
    %17 = arith.subf %13, %16 : vector<8x8xf32>
    %18 = math.exp %17 : vector<8x8xf32>
    %cst_7 = arith.constant dense<0.000000e+00> : vector<8xf32>
    %19 = vector.multi_reduction <add>, %18, %cst_7 [1] : vector<8x8xf32> to vector<8xf32>
    %20 = vector.shape_cast %19 : vector<8xf32> to vector<8x1xf32>
    %cst_8 = arith.constant dense<0.000000e+00> : vector<8x8xf32>
    %21 = tpu.matmul %18, %8, %cst_8 {dimension_numbers = #tpu.dot_dimension_numbers<[1], [0], [0], [1], [0, 0, 1, 1], [], []>} : vector<8x8xf32>, vector<8x8xf32>, vector<8x8xf32> -> vector<8x8xf32>
    %cst_9 = arith.constant 1.000000e+00 : f32
    %22 = vector.broadcast %cst_9 : f32 to vector<8x1xf32>
    %23 = arith.divf %22, %20 : vector<8x1xf32>
    %24 = vector.broadcast %23 : vector<8x1xf32> to vector<8x8xf32>
    %25 = arith.mulf %21, %24 : vector<8x8xf32>
    %c0_10 = arith.constant 0 : index
    %c0_11 = arith.constant 0 : index
    %26 = vector.load %arg5[%c0_10, %c0_11] : memref<16x32xf32, #tpu.memory_space<vmem>>, vector<8x8xf32>
    tpu.vector_store %arg5[%c0_10, %c0_11], %25 {strides = array<i32>} : memref<16x32xf32, #tpu.memory_space<vmem>>, vector<8x8xf32>,
    %27 = vector.extract_strided_slice %2 {offsets = [0, 8], sizes = [8, 8], strides = [1, 1]} : vector<16x96xf32> to vector<8x8xf32>
    %28 = vector.extract_strided_slice %2 {offsets = [0, 40], sizes = [8, 8], strides = [1, 1]} : vector<16x96xf32> to vector<8x8xf32>
    %29 = vector.extract_strided_slice %2 {offsets = [0, 72], sizes = [8, 8], strides = [1, 1]} : vector<16x96xf32> to vector<8x8xf32>
    %cst_12 = arith.constant dense<0.000000e+00> : vector<8x8xf32>
    %30 = tpu.matmul %27, %28, %cst_12 {dimension_numbers = #tpu.dot_dimension_numbers<[1], [1], [0], [0], [0, 0, 1, 0], [], []>} : vector<8x8xf32>, vector<8x8xf32>, vector<8x8xf32> -> vector<8x8xf32>
    %cst_13 = arith.constant 0.353553385 : f32
    %31 = vector.broadcast %cst_13 : f32 to vector<8x8xf32>
    %32 = arith.mulf %30, %31 : vector<8x8xf32>
    %cst_14 = arith.constant 0xFF800000 : f32
    %33 = vector.broadcast %cst_14 : f32 to vector<8x8xf32>
    %34 = arith.select %5, %32, %33 : vector<8x8xi1>, vector<8x8xf32>
    %cst_15 = arith.constant dense<0xFF800000> : vector<8xf32>
    %35 = vector.multi_reduction <maximumf>, %34, %cst_15 [1] : vector<8x8xf32> to vector<8xf32>
    %36 = vector.shape_cast %35 : vector<8xf32> to vector<8x1xf32>
    %37 = vector.broadcast %36 : vector<8x1xf32> to vector<8x8xf32>
    %38 = arith.subf %34, %37 : vector<8x8xf32>
    %39 = math.exp %38 : vector<8x8xf32>
    %cst_16 = arith.constant dense<0.000000e+00> : vector<8xf32>
    %40 = vector.multi_reduction <add>, %39, %cst_16 [1] : vector<8x8xf32> to vector<8xf32>
    %41 = vector.shape_cast %40 : vector<8xf32> to vector<8x1xf32>
    %cst_17 = arith.constant dense<0.000000e+00> : vector<8x8xf32>
    %42 = tpu.matmul %39, %29, %cst_17 {dimension_numbers = #tpu.dot_dimension_numbers<[1], [0], [0], [1], [0, 0, 1, 1], [], []>} : vector<8x8xf32>, vector<8x8xf32>, vector<8x8xf32> -> vector<8x8xf32>
    %cst_18 = arith.constant 1.000000e+00 : f32
    %43 = vector.broadcast %cst_18 : f32 to vector<8x1xf32>
    %44 = arith.divf %43, %41 : vector<8x1xf32>
    %45 = vector.broadcast %44 : vector<8x1xf32> to vector<8x8xf32>
    %46 = arith.mulf %42, %45 : vector<8x8xf32>
    %c0_19 = arith.constant 0 : index
    %c8 = arith.constant 8 : index
    %47 = vector.load %arg5[%c0_19, %c8] : memref<16x32xf32, #tpu.memory_space<vmem>>, vector<8x8xf32>
    tpu.vector_store %arg5[%c0_19, %c8], %46 {strides = array<i32>} : memref<16x32xf32, #tpu.memory_space<vmem>>, vector<8x8xf32>,
    %48 = vector.extract_strided_slice %2 {offsets = [0, 16], sizes = [8, 8], strides = [1, 1]} : vector<16x96xf32> to vector<8x8xf32>
    %49 = vector.extract_strided_slice %2 {offsets = [0, 48], sizes = [8, 8], strides = [1, 1]} : vector<16x96xf32> to vector<8x8xf32>
    %50 = vector.extract_strided_slice %2 {offsets = [0, 80], sizes = [8, 8], strides = [1, 1]} : vector<16x96xf32> to vector<8x8xf32>
    %cst_20 = arith.constant dense<0.000000e+00> : vector<8x8xf32>
    %51 = tpu.matmul %48, %49, %cst_20 {dimension_numbers = #tpu.dot_dimension_numbers<[1], [1], [0], [0], [0, 0, 1, 0], [], []>} : vector<8x8xf32>, vector<8x8xf32>, vector<8x8xf32> -> vector<8x8xf32>
    %cst_21 = arith.constant 0.353553385 : f32
    %52 = vector.broadcast %cst_21 : f32 to vector<8x8xf32>
    %53 = arith.mulf %51, %52 : vector<8x8xf32>
    %cst_22 = arith.constant 0xFF800000 : f32
    %54 = vector.broadcast %cst_22 : f32 to vector<8x8xf32>
    %55 = arith.select %5, %53, %54 : vector<8x8xi1>, vector<8x8xf32>
    %cst_23 = arith.constant dense<0xFF800000> : vector<8xf32>
    %56 = vector.multi_reduction <maximumf>, %55, %cst_23 [1] : vector<8x8xf32> to vector<8xf32>
    %57 = vector.shape_cast %56 : vector<8xf32> to vector<8x1xf32>
    %58 = vector.broadcast %57 : vector<8x1xf32> to vector<8x8xf32>
    %59 = arith.subf %55, %58 : vector<8x8xf32>
    %60 = math.exp %59 : vector<8x8xf32>
    %cst_24 = arith.constant dense<0.000000e+00> : vector<8xf32>
    %61 = vector.multi_reduction <add>, %60, %cst_24 [1] : vector<8x8xf32> to vector<8xf32>
    %62 = vector.shape_cast %61 : vector<8xf32> to vector<8x1xf32>
    %cst_25 = arith.constant dense<0.000000e+00> : vector<8x8xf32>
    %63 = tpu.matmul %60, %50, %cst_25 {dimension_numbers = #tpu.dot_dimension_numbers<[1], [0], [0], [1], [0, 0, 1, 1], [], []>} : vector<8x8xf32>, vector<8x8xf32>, vector<8x8xf32> -> vector<8x8xf32>
    %cst_26 = arith.constant 1.000000e+00 : f32
    %64 = vector.broadcast %cst_26 : f32 to vector<8x1xf32>
    %65 = arith.divf %64, %62 : vector<8x1xf32>
    %66 = vector.broadcast %65 : vector<8x1xf32> to vector<8x8xf32>
    %67 = arith.mulf %63, %66 : vector<8x8xf32>
    %c0_27 = arith.constant 0 : index
    %c16 = arith.constant 16 : index
    %68 = vector.load %arg5[%c0_27, %c16] : memref<16x32xf32, #tpu.memory_space<vmem>>, vector<8x8xf32>
    tpu.vector_store %arg5[%c0_27, %c16], %67 {strides = array<i32>} : memref<16x32xf32, #tpu.memory_space<vmem>>, vector<8x8xf32>,
    %69 = vector.extract_strided_slice %2 {offsets = [0, 24], sizes = [8, 8], strides = [1, 1]} : vector<16x96xf32> to vector<8x8xf32>
    %70 = vector.extract_strided_slice %2 {offsets = [0, 56], sizes = [8, 8], strides = [1, 1]} : vector<16x96xf32> to vector<8x8xf32>
    %71 = vector.extract_strided_slice %2 {offsets = [0, 88], sizes = [8, 8], strides = [1, 1]} : vector<16x96xf32> to vector<8x8xf32>
    %cst_28 = arith.constant dense<0.000000e+00> : vector<8x8xf32>
    %72 = tpu.matmul %69, %70, %cst_28 {dimension_numbers = #tpu.dot_dimension_numbers<[1], [1], [0], [0], [0, 0, 1, 0], [], []>} : vector<8x8xf32>, vector<8x8xf32>, vector<8x8xf32> -> vector<8x8xf32>
    %cst_29 = arith.constant 0.353553385 : f32
    %73 = vector.broadcast %cst_29 : f32 to vector<8x8xf32>
    %74 = arith.mulf %72, %73 : vector<8x8xf32>
    %cst_30 = arith.constant 0xFF800000 : f32
    %75 = vector.broadcast %cst_30 : f32 to vector<8x8xf32>
    %76 = arith.select %5, %74, %75 : vector<8x8xi1>, vector<8x8xf32>
    %cst_31 = arith.constant dense<0xFF800000> : vector<8xf32>
    %77 = vector.multi_reduction <maximumf>, %76, %cst_31 [1] : vector<8x8xf32> to vector<8xf32>
    %78 = vector.shape_cast %77 : vector<8xf32> to vector<8x1xf32>
    %79 = vector.broadcast %78 : vector<8x1xf32> to vector<8x8xf32>
    %80 = arith.subf %76, %79 : vector<8x8xf32>
    %81 = math.exp %80 : vector<8x8xf32>
    %cst_32 = arith.constant dense<0.000000e+00> : vector<8xf32>
    %82 = vector.multi_reduction <add>, %81, %cst_32 [1] : vector<8x8xf32> to vector<8xf32>
    %83 = vector.shape_cast %82 : vector<8xf32> to vector<8x1xf32>
    %cst_33 = arith.constant dense<0.000000e+00> : vector<8x8xf32>
    %84 = tpu.matmul %81, %71, %cst_33 {dimension_numbers = #tpu.dot_dimension_numbers<[1], [0], [0], [1], [0, 0, 1, 1], [], []>} : vector<8x8xf32>, vector<8x8xf32>, vector<8x8xf32> -> vector<8x8xf32>
    %cst_34 = arith.constant 1.000000e+00 : f32
    %85 = vector.broadcast %cst_34 : f32 to vector<8x1xf32>
    %86 = arith.divf %85, %83 : vector<8x1xf32>
    %87 = vector.broadcast %86 : vector<8x1xf32> to vector<8x8xf32>
    %88 = arith.mulf %84, %87 : vector<8x8xf32>
    %c0_35 = arith.constant 0 : index
    %c24 = arith.constant 24 : index
    %89 = vector.load %arg5[%c0_35, %c24] : memref<16x32xf32, #tpu.memory_space<vmem>>, vector<8x8xf32>
    tpu.vector_store %arg5[%c0_35, %c24], %88 {strides = array<i32>} : memref<16x32xf32, #tpu.memory_space<vmem>>, vector<8x8xf32>,
    %90 = vector.extract_strided_slice %2 {offsets = [8, 0], sizes = [8, 8], strides = [1, 1]} : vector<16x96xf32> to vector<8x8xf32>
    %91 = vector.extract_strided_slice %2 {offsets = [8, 32], sizes = [8, 8], strides = [1, 1]} : vector<16x96xf32> to vector<8x8xf32>
    %92 = vector.extract_strided_slice %2 {offsets = [8, 64], sizes = [8, 8], strides = [1, 1]} : vector<16x96xf32> to vector<8x8xf32>
    %cst_36 = arith.constant dense<0.000000e+00> : vector<8x8xf32>
    %93 = tpu.matmul %90, %91, %cst_36 {dimension_numbers = #tpu.dot_dimension_numbers<[1], [1], [0], [0], [0, 0, 1, 0], [], []>} : vector<8x8xf32>, vector<8x8xf32>, vector<8x8xf32> -> vector<8x8xf32>
    %cst_37 = arith.constant 0.353553385 : f32
    %94 = vector.broadcast %cst_37 : f32 to vector<8x8xf32>
    %95 = arith.mulf %93, %94 : vector<8x8xf32>
    %cst_38 = arith.constant 0xFF800000 : f32
    %96 = vector.broadcast %cst_38 : f32 to vector<8x8xf32>
    %97 = arith.select %5, %95, %96 : vector<8x8xi1>, vector<8x8xf32>
    %cst_39 = arith.constant dense<0xFF800000> : vector<8xf32>
    %98 = vector.multi_reduction <maximumf>, %97, %cst_39 [1] : vector<8x8xf32> to vector<8xf32>
    %99 = vector.shape_cast %98 : vector<8xf32> to vector<8x1xf32>
    %100 = vector.broadcast %99 : vector<8x1xf32> to vector<8x8xf32>
    %101 = arith.subf %97, %100 : vector<8x8xf32>
    %102 = math.exp %101 : vector<8x8xf32>
    %cst_40 = arith.constant dense<0.000000e+00> : vector<8xf32>
    %103 = vector.multi_reduction <add>, %102, %cst_40 [1] : vector<8x8xf32> to vector<8xf32>
    %104 = vector.shape_cast %103 : vector<8xf32> to vector<8x1xf32>
    %cst_41 = arith.constant dense<0.000000e+00> : vector<8x8xf32>
    %105 = tpu.matmul %102, %92, %cst_41 {dimension_numbers = #tpu.dot_dimension_numbers<[1], [0], [0], [1], [0, 0, 1, 1], [], []>} : vector<8x8xf32>, vector<8x8xf32>, vector<8x8xf32> -> vector<8x8xf32>
    %cst_42 = arith.constant 1.000000e+00 : f32
    %106 = vector.broadcast %cst_42 : f32 to vector<8x1xf32>
    %107 = arith.divf %106, %104 : vector<8x1xf32>
    %108 = vector.broadcast %107 : vector<8x1xf32> to vector<8x8xf32>
    %109 = arith.mulf %105, %108 : vector<8x8xf32>
    %c8_43 = arith.constant 8 : index
    %c0_44 = arith.constant 0 : index
    %110 = vector.load %arg5[%c8_43, %c0_44] : memref<16x32xf32, #tpu.memory_space<vmem>>, vector<8x8xf32>
    tpu.vector_store %arg5[%c8_43, %c0_44], %109 {strides = array<i32>} : memref<16x32xf32, #tpu.memory_space<vmem>>, vector<8x8xf32>,
    %111 = vector.extract_strided_slice %2 {offsets = [8, 8], sizes = [8, 8], strides = [1, 1]} : vector<16x96xf32> to vector<8x8xf32>
    %112 = vector.extract_strided_slice %2 {offsets = [8, 40], sizes = [8, 8], strides = [1, 1]} : vector<16x96xf32> to vector<8x8xf32>
    %113 = vector.extract_strided_slice %2 {offsets = [8, 72], sizes = [8, 8], strides = [1, 1]} : vector<16x96xf32> to vector<8x8xf32>
    %cst_45 = arith.constant dense<0.000000e+00> : vector<8x8xf32>
    %114 = tpu.matmul %111, %112, %cst_45 {dimension_numbers = #tpu.dot_dimension_numbers<[1], [1], [0], [0], [0, 0, 1, 0], [], []>} : vector<8x8xf32>, vector<8x8xf32>, vector<8x8xf32> -> vector<8x8xf32>
    %cst_46 = arith.constant 0.353553385 : f32
    %115 = vector.broadcast %cst_46 : f32 to vector<8x8xf32>
    %116 = arith.mulf %114, %115 : vector<8x8xf32>
    %cst_47 = arith.constant 0xFF800000 : f32
    %117 = vector.broadcast %cst_47 : f32 to vector<8x8xf32>
    %118 = arith.select %5, %116, %117 : vector<8x8xi1>, vector<8x8xf32>
    %cst_48 = arith.constant dense<0xFF800000> : vector<8xf32>
    %119 = vector.multi_reduction <maximumf>, %118, %cst_48 [1] : vector<8x8xf32> to vector<8xf32>
    %120 = vector.shape_cast %119 : vector<8xf32> to vector<8x1xf32>
    %121 = vector.broadcast %120 : vector<8x1xf32> to vector<8x8xf32>
    %122 = arith.subf %118, %121 : vector<8x8xf32>
    %123 = math.exp %122 : vector<8x8xf32>
    %cst_49 = arith.constant dense<0.000000e+00> : vector<8xf32>
    %124 = vector.multi_reduction <add>, %123, %cst_49 [1] : vector<8x8xf32> to vector<8xf32>
    %125 = vector.shape_cast %124 : vector<8xf32> to vector<8x1xf32>
    %cst_50 = arith.constant dense<0.000000e+00> : vector<8x8xf32>
    %126 = tpu.matmul %123, %113, %cst_50 {dimension_numbers = #tpu.dot_dimension_numbers<[1], [0], [0], [1], [0, 0, 1, 1], [], []>} : vector<8x8xf32>, vector<8x8xf32>, vector<8x8xf32> -> vector<8x8xf32>
    %cst_51 = arith.constant 1.000000e+00 : f32
    %127 = vector.broadcast %cst_51 : f32 to vector<8x1xf32>
    %128 = arith.divf %127, %125 : vector<8x1xf32>
    %129 = vector.broadcast %128 : vector<8x1xf32> to vector<8x8xf32>
    %130 = arith.mulf %126, %129 : vector<8x8xf32>
    %c8_52 = arith.constant 8 : index
    %c8_53 = arith.constant 8 : index
    %131 = vector.load %arg5[%c8_52, %c8_53] : memref<16x32xf32, #tpu.memory_space<vmem>>, vector<8x8xf32>
    tpu.vector_store %arg5[%c8_52, %c8_53], %130 {strides = array<i32>} : memref<16x32xf32, #tpu.memory_space<vmem>>, vector<8x8xf32>,
    %132 = vector.extract_strided_slice %2 {offsets = [8, 16], sizes = [8, 8], strides = [1, 1]} : vector<16x96xf32> to vector<8x8xf32>
    %133 = vector.extract_strided_slice %2 {offsets = [8, 48], sizes = [8, 8], strides = [1, 1]} : vector<16x96xf32> to vector<8x8xf32>
    %134 = vector.extract_strided_slice %2 {offsets = [8, 80], sizes = [8, 8], strides = [1, 1]} : vector<16x96xf32> to vector<8x8xf32>
    %cst_54 = arith.constant dense<0.000000e+00> : vector<8x8xf32>
    %135 = tpu.matmul %132, %133, %cst_54 {dimension_numbers = #tpu.dot_dimension_numbers<[1], [1], [0], [0], [0, 0, 1, 0], [], []>} : vector<8x8xf32>, vector<8x8xf32>, vector<8x8xf32> -> vector<8x8xf32>
    %cst_55 = arith.constant 0.353553385 : f32
    %136 = vector.broadcast %cst_55 : f32 to vector<8x8xf32>
    %137 = arith.mulf %135, %136 : vector<8x8xf32>
    %cst_56 = arith.constant 0xFF800000 : f32
    %138 = vector.broadcast %cst_56 : f32 to vector<8x8xf32>
    %139 = arith.select %5, %137, %138 : vector<8x8xi1>, vector<8x8xf32>
    %cst_57 = arith.constant dense<0xFF800000> : vector<8xf32>
    %140 = vector.multi_reduction <maximumf>, %139, %cst_57 [1] : vector<8x8xf32> to vector<8xf32>
    %141 = vector.shape_cast %140 : vector<8xf32> to vector<8x1xf32>
    %142 = vector.broadcast %141 : vector<8x1xf32> to vector<8x8xf32>
    %143 = arith.subf %139, %142 : vector<8x8xf32>
    %144 = math.exp %143 : vector<8x8xf32>
    %cst_58 = arith.constant dense<0.000000e+00> : vector<8xf32>
    %145 = vector.multi_reduction <add>, %144, %cst_58 [1] : vector<8x8xf32> to vector<8xf32>
    %146 = vector.shape_cast %145 : vector<8xf32> to vector<8x1xf32>
    %cst_59 = arith.constant dense<0.000000e+00> : vector<8x8xf32>
    %147 = tpu.matmul %144, %134, %cst_59 {dimension_numbers = #tpu.dot_dimension_numbers<[1], [0], [0], [1], [0, 0, 1, 1], [], []>} : vector<8x8xf32>, vector<8x8xf32>, vector<8x8xf32> -> vector<8x8xf32>
    %cst_60 = arith.constant 1.000000e+00 : f32
    %148 = vector.broadcast %cst_60 : f32 to vector<8x1xf32>
    %149 = arith.divf %148, %146 : vector<8x1xf32>
    %150 = vector.broadcast %149 : vector<8x1xf32> to vector<8x8xf32>
    %151 = arith.mulf %147, %150 : vector<8x8xf32>
    %c8_61 = arith.constant 8 : index
    %c16_62 = arith.constant 16 : index
    %152 = vector.load %arg5[%c8_61, %c16_62] : memref<16x32xf32, #tpu.memory_space<vmem>>, vector<8x8xf32>
    tpu.vector_store %arg5[%c8_61, %c16_62], %151 {strides = array<i32>} : memref<16x32xf32, #tpu.memory_space<vmem>>, vector<8x8xf32>,
    %153 = vector.extract_strided_slice %2 {offsets = [8, 24], sizes = [8, 8], strides = [1, 1]} : vector<16x96xf32> to vector<8x8xf32>
    %154 = vector.extract_strided_slice %2 {offsets = [8, 56], sizes = [8, 8], strides = [1, 1]} : vector<16x96xf32> to vector<8x8xf32>
    %155 = vector.extract_strided_slice %2 {offsets = [8, 88], sizes = [8, 8], strides = [1, 1]} : vector<16x96xf32> to vector<8x8xf32>
    %cst_63 = arith.constant dense<0.000000e+00> : vector<8x8xf32>
    %156 = tpu.matmul %153, %154, %cst_63 {dimension_numbers = #tpu.dot_dimension_numbers<[1], [1], [0], [0], [0, 0, 1, 0], [], []>} : vector<8x8xf32>, vector<8x8xf32>, vector<8x8xf32> -> vector<8x8xf32>
    %cst_64 = arith.constant 0.353553385 : f32
    %157 = vector.broadcast %cst_64 : f32 to vector<8x8xf32>
    %158 = arith.mulf %156, %157 : vector<8x8xf32>
    %cst_65 = arith.constant 0xFF800000 : f32
    %159 = vector.broadcast %cst_65 : f32 to vector<8x8xf32>
    %160 = arith.select %5, %158, %159 : vector<8x8xi1>, vector<8x8xf32>
    %cst_66 = arith.constant dense<0xFF800000> : vector<8xf32>
    %161 = vector.multi_reduction <maximumf>, %160, %cst_66 [1] : vector<8x8xf32> to vector<8xf32>
    %162 = vector.shape_cast %161 : vector<8xf32> to vector<8x1xf32>
    %163 = vector.broadcast %162 : vector<8x1xf32> to vector<8x8xf32>
    %164 = arith.subf %160, %163 : vector<8x8xf32>
    %165 = math.exp %164 : vector<8x8xf32>
    %cst_67 = arith.constant dense<0.000000e+00> : vector<8xf32>
    %166 = vector.multi_reduction <add>, %165, %cst_67 [1] : vector<8x8xf32> to vector<8xf32>
    %167 = vector.shape_cast %166 : vector<8xf32> to vector<8x1xf32>
    %cst_68 = arith.constant dense<0.000000e+00> : vector<8x8xf32>
    %168 = tpu.matmul %165, %155, %cst_68 {dimension_numbers = #tpu.dot_dimension_numbers<[1], [0], [0], [1], [0, 0, 1, 1], [], []>} : vector<8x8xf32>, vector<8x8xf32>, vector<8x8xf32> -> vector<8x8xf32>
    %cst_69 = arith.constant 1.000000e+00 : f32
    %169 = vector.broadcast %cst_69 : f32 to vector<8x1xf32>
    %170 = arith.divf %169, %167 : vector<8x1xf32>
    %171 = vector.broadcast %170 : vector<8x1xf32> to vector<8x8xf32>
    %172 = arith.mulf %168, %171 : vector<8x8xf32>
    %c8_70 = arith.constant 8 : index
    %c24_71 = arith.constant 24 : index
    %173 = vector.load %arg5[%c8_70, %c24_71] : memref<16x32xf32, #tpu.memory_space<vmem>>, vector<8x8xf32>
    tpu.vector_store %arg5[%c8_70, %c24_71], %172 {strides = array<i32>} : memref<16x32xf32, #tpu.memory_space<vmem>>, vector<8x8xf32>,
    %c0_72 = arith.constant 0 : index
    %c0_73 = arith.constant 0 : index
    %174 = vector.load %arg5[%c0_72, %c0_73] : memref<16x32xf32, #tpu.memory_space<vmem>>, vector<16x32xf32>
    %c0_74 = arith.constant 0 : index
    %c0_75 = arith.constant 0 : index
    %175 = vector.load %arg3[%c0_74, %c0_75] : memref<32x32xf32, #tpu.memory_space<vmem>>, vector<32x32xf32>
    %cst_76 = arith.constant dense<0.000000e+00> : vector<16x32xf32>
    %176 = tpu.matmul %174, %175, %cst_76 {dimension_numbers = #tpu.dot_dimension_numbers<[1], [1], [0], [0], [0, 0, 1, 0], [], []>} : vector<16x32xf32>, vector<32x32xf32>, vector<16x32xf32> -> vector<16x32xf32>
    %c0_77 = arith.constant 0 : index
    %c0_78 = arith.constant 0 : index
    %177 = vector.load %arg4[%c0_77, %c0_78] : memref<16x32xf32, #tpu.memory_space<vmem>>, vector<16x32xf32>
    tpu.vector_store %arg4[%c0_77, %c0_78], %176 {strides = array<i32>} : memref<16x32xf32, #tpu.memory_space<vmem>>, vector<16x32xf32>,
    return
  }
  func.func @transform_0(%arg0: i32) -> (i32, i32) {
    %c0_i32 = arith.constant 0 : i32
    %c0_i32_0 = arith.constant 0 : i32
    %c0_i32_1 = arith.constant 0 : i32
    return %c0_i32, %c0_i32_0 : i32, i32
  }
  func.func @transform_1(%arg0: i32) -> (i32, i32) {
    %c0_i32 = arith.constant 0 : i32
    %c0_i32_0 = arith.constant 0 : i32
    %c0_i32_1 = arith.constant 0 : i32
    return %c0_i32, %c0_i32_0 : i32, i32
  }
  func.func @transform_2(%arg0: i32) -> (i32, i32) {
    %c0_i32 = arith.constant 0 : i32
    %c0_i32_0 = arith.constant 0 : i32
    %c0_i32_1 = arith.constant 0 : i32
    return %c0_i32, %c0_i32_0 : i32, i32
  }
  func.func @transform_3(%arg0: i32) -> (i32, i32) {
    %c0_i32 = arith.constant 0 : i32
    %c0_i32_0 = arith.constant 0 : i32
    %c0_i32_1 = arith.constant 0 : i32
    return %c0_i32, %c0_i32_0 : i32, i32
  }
}

</mosaic_0001>

<llo_original>
// kernel: hf_wrapper_forward.1
$region0: #{hf_wrapper_forward.1}
  #allocation0 [shape = 'u32[]', space=smem, size = 0x4, offset = 0x4, fixed_abs, tag = 'smem constant byte address 0x4 - core index']
  #allocation1 [shape = 'u32[144,128]{1,0:T(1,128)}', space=vmem, size = 0x12000, scoped, tag = 'internal scratch']
  #allocation2 [shape = 'f32[16,32]{1,0:T(8,128)}', space=vmem, size = 0x2000, scoped, tag = 'scratch operand']
  %s0 = inlined_call_operand.vmem [shape: f32[16,32], index: 0, kind: input, shape index: {}]
  %s1 = inlined_call_operand.vmem [shape: f32[96,32], index: 1, kind: input, shape index: {}]
  %s2 = inlined_call_operand.vmem [shape: f32[32,32], index: 2, kind: input, shape index: {}]
  %s3 = inlined_call_operand.hbm [shape: f32[16,32], index: 3, kind: output, shape index: {}]
  %s4 = sld [smem:[#allocation0]]
  $region22: #{hf_wrapper_forward.1} parent=0
    _
  %s6 = ssub.s32 1, %s4
  %s7 = scalar_select 0, %s6, %s4
  $region1: #{hf_wrapper_forward.1} parent=0
    #allocation3 [shape = 'u8[8192]{0}', space=vmem, size = 0x2000, scoped, tag = 'output window, operand 0, single buffered']
    #allocation4 [shape = 's32[1]{0}', space=sflag, size = 0x4, scoped, tag = 'scoped memory for hf_wrapper_forward.1']
    %8 = vsyncpa [#allocation4], 0
    // Predicated region
    $region2: #{hf_wrapper_forward.1} parent=1 // pred_check
      _
    $region3: #{hf_wrapper_forward.1} parent=1 // pred_check_branch
      %10 = sbr.rel (0) target = $region5
    $region4: #{hf_wrapper_forward.1} parent=1 // pred_region
      _
    $region5: #{hf_wrapper_forward.1} parent=1 // pred_fallthru
      _
    // Predicated region
    $region6: #{hf_wrapper_forward.1} parent=1 // pred_check
      _
    $region7: #{hf_wrapper_forward.1} parent=1 // pred_check_branch
      %12 = sbr.rel (0) target = $region9
    $region8: #{hf_wrapper_forward.1} parent=1 // pred_region
      _
    $region9: #{hf_wrapper_forward.1} parent=1 // pred_fallthru
      _
    // Predicated region
    $region10: #{hf_wrapper_forward.1} parent=1 // pred_check
      _
    $region11: #{hf_wrapper_forward.1} parent=1 // pred_check_branch
      %14 = sbr.rel (0) target = $region13
    $region12: #{hf_wrapper_forward.1} parent=1 // pred_region
      _
    $region13: #{hf_wrapper_forward.1} parent=1 // pred_fallthru
      _
    %v15 = vld [vmem:[%s0] sm:$0xff]
    %v16 = vld [vmem:[%s0 + $0x8] sm:$0xff]
    %v17 = vld [vmem:[%s1] sm:$0xff]
    %v18 = vld [vmem:[%s1 + $0x8] sm:$0xff]
    %v19 = vld [vmem:[%s1 + $0x10] sm:$0xff]
    %v20 = vld [vmem:[%s1 + $0x18] sm:$0xff]
    %v21 = vld [vmem:[%s1 + $0x20] sm:$0xff]
    %v22 = vld [vmem:[%s1 + $0x28] sm:$0xff]
    %v23 = vld [vmem:[%s1 + $0x30] sm:$0xff]
    %v24 = vld [vmem:[%s1 + $0x38] sm:$0xff]
    %v25 = vld [vmem:[%s1 + $0x40] sm:$0xff]
    %v26 = vld [vmem:[%s1 + $0x48] sm:$0xff]
    %v27 = vld [vmem:[%s1 + $0x50] sm:$0xff]
    %v28 = vld [vmem:[%s1 + $0x58] sm:$0xff]
    %vm29 = vcmask 261120
    %v31 = vsel %vm29, %v15, 0
    %v34 = vsel %vm29, %v16, 0
    %v37 = vsel %vm29, %v17, 0
    %v40 = vsel %vm29, %v18, 0
    %v43 = vsel %vm29, %v19, 0
    %v46 = vsel %vm29, %v20, 0
    %v49 = vsel %vm29, %v21, 0
    %v52 = vsel %vm29, %v22, 0
    %v55 = vsel %vm29, %v23, 0
    %v58 = vsel %vm29, %v24, 0
    %v61 = vsel %vm29, %v25, 0
    %v64 = vsel %vm29, %v26, 0
    %v67 = vsel %vm29, %v27, 0
    %v70 = vsel %vm29, %v28, 0
    %72 = vmatprep.subr.mxu0 0.0
    %73 = vmatpush1.xpose.msra.mxu0 0.0
    %74 = vmatprep.subr.mxu0 0.0
    %75 = vmatpush1.xpose.msra.mxu0 0.0
    %76 = vmatprep.subr.mxu0 0.0
    %77 = vmatpush1.xpose.msra.mxu0 0.0
    %78 = vmatprep.subr.mxu0 0.0
    %79 = vmatpush1.xpose.msra.mxu0 0.0
    %80 = vmatprep.subr.mxu0 0.0
    %81 = vmatpush1.xpose.msra.mxu0 %v70
    %82 = vmatprep.subr.mxu0 0.0
    %83 = vmatpush1.xpose.msra.mxu0 %v67
    %84 = vmatprep.subr.mxu0 0.0
    %85 = vmatpush1.xpose.msra.mxu0 %v64
    %86 = vmatprep.subr.mxu0 0.0
    %87 = vmatpush1.xpose.msra.mxu0 %v61
    %88 = vmatprep.subr.mxu0 0.0
    %89 = vmatpush1.xpose.msra.mxu0 %v58
    %90 = vmatprep.subr.mxu0 0.0
    %91 = vmatpush1.xpose.msra.mxu0 %v55
    %92 = vmatprep.subr.mxu0 0.0
    %93 = vmatpush1.xpose.msra.mxu0 %v52
    %94 = vmatprep.subr.mxu0 0.0
    %95 = vmatpush1.xpose.msra.mxu0 %v49
    %96 = vmatprep.subr.mxu0 0.0
    %97 = vmatpush1.xpose.msra.mxu0 %v46
    %98 = vmatprep.subr.mxu0 0.0
    %99 = vmatpush1.xpose.msra.mxu0 %v43
    %100 = vmatprep.subr.mxu0 0.0
    %101 = vmatpush1.xpose.msra.mxu0 %v40
    %102 = vmatprep.subr.mxu0 0.0
    %103 = vmatpush1.xpose.msra.mxu0 %v37
    %104 = vmatprep.subr.mxu0 0.0
    %105 = vmatpush2.xpose.msra.mxu0 0.0
    %106 = vmatprep.subr.mxu0 0.0
    %107 = vmatpush2.xpose.msra.mxu0 0.0
    %108 = vmatprep.subr.mxu0 0.0
    %109 = vmatpush2.xpose.msra.mxu0 0.0
    %110 = vmatprep.subr.mxu0 0.0
    %111 = vmatpush2.xpose.msra.mxu0 0.0
    %112 = vmatprep.subr.mxu0 0.0
    %113 = vmatpush2.xpose.msra.mxu0 0.0
    %114 = vmatprep.subr.mxu0 0.0
    %115 = vmatpush2.xpose.msra.mxu0 0.0
    %116 = vmatprep.subr.mxu0 0.0
    %117 = vmatpush2.xpose.msra.mxu0 0.0
    %118 = vmatprep.subr.mxu0 0.0
    %119 = vmatpush2.xpose.msra.mxu0 0.0
    %120 = vmatprep.subr.mxu0 0.0
    %121 = vmatpush2.xpose.msra.mxu0 0.0
    %122 = vmatprep.subr.mxu0 0.0
    %123 = vmatpush2.xpose.msra.mxu0 0.0
    %124 = vmatprep.subr.mxu0 0.0
    %125 = vmatpush2.xpose.msra.mxu0 0.0
    %126 = vmatprep.subr.mxu0 0.0
    %127 = vmatpush2.xpose.msra.mxu0 0.0
    %128 = vmatprep.subr.mxu0 0.0
    %129 = vmatpush2.xpose.msra.mxu0 0.0
    %130 = vmatprep.subr.mxu0 0.0
    %131 = vmatpush2.xpose.msra.mxu0 0.0
    %132 = vmatprep.subr.mxu0 0.0
    %133 = vmatpush2.xpose.msra.mxu0 0.0
    %134 = vmatprep.subr.mxu0 0.0
    %135 = vmatpush2.xpose.msra.mxu0 0.0
    %136 = vmatprep.mubr.f32.mxu0 0.0
    %137 = vmatmul.mubr.f32.gmra.mxu0 %v31
    %v138 = vpop.f32.mrf.mxu0
    %v139 = vadd.f32 0.0, %v138
    %v140 = vpop.f32.mrf.mxu0
    %141 = vmatprep.mubr.f32.mxu0 0.0
    %142 = vmatmul.mubr.f32.gmra.mxu0 %v34
    %v143 = vpop.f32.mrf.mxu0
    %v144 = vadd.f32 0.0, %v143
    %v145 = vpop.f32.mrf.mxu0
    %146 = vdwg.mxu0
    %v147 = vlaneseq
    %v148 = vshrl.u32 %v147, 7
    %v149 = vlaneseq
    %v150 = vand.u32 %v149, 127
    %vm151 = vcmp.le.s32.totalorder %v150, %v148
    %153 = vrot.lane.b32.xlu0 %v139, 96
    %v154 = vpop.permute.xlu0 %153
    %vm155 = vcmask 64512
    %v156 = vsel %vm155, %v139, 0
    %v158 = vsel %vm155, %v154, 0
    %160 = vmatprep.subr.mxu0 0.0
    %161 = vmatpush1.xpose.msra.mxu0 0.0
    %162 = vmatprep.subr.mxu0 0.0
    %163 = vmatpush1.xpose.msra.mxu0 0.0
    %164 = vmatprep.subr.mxu0 0.0
    %165 = vmatpush1.xpose.msra.mxu0 0.0
    %166 = vmatprep.subr.mxu0 0.0
    %167 = vmatpush1.xpose.msra.mxu0 0.0
    %168 = vmatprep.subr.mxu0 0.0
    %169 = vmatpush1.xpose.msra.mxu0 0.0
    %170 = vmatprep.subr.mxu0 0.0
    %171 = vmatpush1.xpose.msra.mxu0 0.0
    %172 = vmatprep.subr.mxu0 0.0
    %173 = vmatpush1.xpose.msra.mxu0 0.0
    %174 = vmatprep.subr.mxu0 0.0
    %175 = vmatpush1.xpose.msra.mxu0 0.0
    %176 = vmatprep.subr.mxu0 0.0
    %177 = vmatpush1.xpose.msra.mxu0 0.0
    %178 = vmatprep.subr.mxu0 0.0
    %179 = vmatpush1.xpose.msra.mxu0 0.0
    %180 = vmatprep.subr.mxu0 0.0
    %181 = vmatpush1.xpose.msra.mxu0 0.0
    %182 = vmatprep.subr.mxu0 0.0
    %183 = vmatpush1.xpose.msra.mxu0 0.0
    %184 = vmatprep.subr.mxu0 0.0
    %185 = vmatpush1.xpose.msra.mxu0 0.0
    %186 = vmatprep.subr.mxu0 0.0
    %187 = vmatpush1.xpose.msra.mxu0 0.0
    %188 = vmatprep.subr.mxu0 0.0
    %189 = vmatpush1.xpose.msra.mxu0 0.0
    %190 = vmatprep.subr.mxu0 0.0
    %191 = vmatpush1.xpose.msra.mxu0 %v158
    %192 = vmatprep.subr.mxu0 0.0
    %193 = vmatpush2.xpose.msra.mxu0 0.0
    %194 = vmatprep.subr.mxu0 0.0
    %195 = vmatpush2.xpose.msra.mxu0 0.0
    %196 = vmatprep.subr.mxu0 0.0
    %197 = vmatpush2.xpose.msra.mxu0 0.0
    %198 = vmatprep.subr.mxu0 0.0
    %199 = vmatpush2.xpose.msra.mxu0 0.0
    %200 = vmatprep.subr.mxu0 0.0
    %201 = vmatpush2.xpose.msra.mxu0 0.0
    %202 = vmatprep.subr.mxu0 0.0
    %203 = vmatpush2.xpose.msra.mxu0 0.0
    %204 = vmatprep.subr.mxu0 0.0
    %205 = vmatpush2.xpose.msra.mxu0 0.0
    %206 = vmatprep.subr.mxu0 0.0
    %207 = vmatpush2.xpose.msra.mxu0 0.0
    %208 = vmatprep.subr.mxu0 0.0
    %209 = vmatpush2.xpose.msra.mxu0 0.0
    %210 = vmatprep.subr.mxu0 0.0
    %211 = vmatpush2.xpose.msra.mxu0 0.0
    %212 = vmatprep.subr.mxu0 0.0
    %213 = vmatpush2.xpose.msra.mxu0 0.0
    %214 = vmatprep.subr.mxu0 0.0
    %215 = vmatpush2.xpose.msra.mxu0 0.0
    %216 = vmatprep.subr.mxu0 0.0
    %217 = vmatpush2.xpose.msra.mxu0 0.0
    %218 = vmatprep.subr.mxu0 0.0
    %219 = vmatpush2.xpose.msra.mxu0 0.0
    %220 = vmatprep.subr.mxu0 0.0
    %221 = vmatpush2.xpose.msra.mxu0 0.0
    %222 = vmatprep.subr.mxu0 0.0
    %223 = vmatpush2.xpose.msra.mxu0 0.0
    %224 = vmatprep.mubr.f32.mxu0 0.0
    %225 = vmatmul.mubr.f32.gmra.mxu0 %v156
    %v226 = vpop.f32.mrf.mxu0
    %v227 = vadd.f32 0.0, %v226
    %v228 = vpop.f32.mrf.mxu0
    %229 = vdwg.mxu0
    %v230 = vmul.f32 %v227, 0.35355338
    %v231 = vsel %vm151, %v230, -inf
    %v232 = vsel %vm155, %v231, -inf
    %233 = vmax.xlane.f32.xlu0 %v232
    %v234 = vpop.xlane.xlu0 %233
    %v235 = vsub.f32 %v231, %v234
    %v236 = vmul.f32 %v235, 1.442695
    %v237 = vpow.pop %v236
    %v238 = vsel %vm155, %v237, 0.0
    %239 = vadd.xlane.f32.xlu0 %v238
    %v240 = vpop.xlane.xlu0 %239
    %241 = vrot.lane.b32.xlu0 %v139, 64
    %v242 = vpop.permute.xlu0 %241
    %v245 = vsel %vm155, %v237, 0
    %247 = vmatprep.subr.mxu0 0.0
    %248 = vmatpush1.msra.mxu0 0.0
    %249 = vmatprep.subr.mxu0 0.0
    %250 = vmatpush1.msra.mxu0 0.0
    %251 = vmatprep.subr.mxu0 0.0
    %252 = vmatpush1.msra.mxu0 0.0
    %253 = vmatprep.subr.mxu0 0.0
    %254 = vmatpush1.msra.mxu0 0.0
    %255 = vmatprep.subr.mxu0 0.0
    %256 = vmatpush1.msra.mxu0 0.0
    %257 = vmatprep.subr.mxu0 0.0
    %258 = vmatpush1.msra.mxu0 0.0
    %259 = vmatprep.subr.mxu0 0.0
    %260 = vmatpush1.msra.mxu0 0.0
    %261 = vmatprep.subr.mxu0 0.0
    %262 = vmatpush1.msra.mxu0 0.0
    %263 = vmatprep.subr.mxu0 0.0
    %264 = vmatpush1.msra.mxu0 0.0
    %265 = vmatprep.subr.mxu0 0.0
    %266 = vmatpush1.msra.mxu0 0.0
    %267 = vmatprep.subr.mxu0 0.0
    %268 = vmatpush1.msra.mxu0 0.0
    %269 = vmatprep.subr.mxu0 0.0
    %270 = vmatpush1.msra.mxu0 0.0
    %271 = vmatprep.subr.mxu0 0.0
    %272 = vmatpush1.msra.mxu0 0.0
    %273 = vmatprep.subr.mxu0 0.0
    %274 = vmatpush1.msra.mxu0 0.0
    %275 = vmatprep.subr.mxu0 0.0
    %276 = vmatpush1.msra.mxu0 0.0
    %277 = vmatprep.subr.mxu0 0.0
    %278 = vmatpush1.msra.mxu0 %v242
    %279 = vmatprep.subr.mxu0 0.0
    %280 = vmatpush2.msra.mxu0 0.0
    %281 = vmatprep.subr.mxu0 0.0
    %282 = vmatpush2.msra.mxu0 0.0
    %283 = vmatprep.subr.mxu0 0.0
    %284 = vmatpush2.msra.mxu0 0.0
    %285 = vmatprep.subr.mxu0 0.0
    %286 = vmatpush2.msra.mxu0 0.0
    %287 = vmatprep.subr.mxu0 0.0
    %288 = vmatpush2.msra.mxu0 0.0
    %289 = vmatprep.subr.mxu0 0.0
    %290 = vmatpush2.msra.mxu0 0.0
    %291 = vmatprep.subr.mxu0 0.0
    %292 = vmatpush2.msra.mxu0 0.0
    %293 = vmatprep.subr.mxu0 0.0
    %294 = vmatpush2.msra.mxu0 0.0
    %295 = vmatprep.subr.mxu0 0.0
    %296 = vmatpush2.msra.mxu0 0.0
    %297 = vmatprep.subr.mxu0 0.0
    %298 = vmatpush2.msra.mxu0 0.0
    %299 = vmatprep.subr.mxu0 0.0
    %300 = vmatpush2.msra.mxu0 0.0
    %301 = vmatprep.subr.mxu0 0.0
    %302 = vmatpush2.msra.mxu0 0.0
    %303 = vmatprep.subr.mxu0 0.0
    %304 = vmatpush2.msra.mxu0 0.0
    %305 = vmatprep.subr.mxu0 0.0
    %306 = vmatpush2.msra.mxu0 0.0
    %307 = vmatprep.subr.mxu0 0.0
    %308 = vmatpush2.msra.mxu0 0.0
    %309 = vmatprep.subr.mxu0 0.0
    %310 = vmatpush2.msra.mxu0 0.0
    %311 = vmatprep.mubr.f32.mxu0 0.0
    %312 = vmatmul.mubr.f32.gmra.mxu0 %v245
    %v313 = vpop.f32.mrf.mxu0
    %v314 = vadd.f32 0.0, %v313
    %v315 = vpop.f32.mrf.mxu0
    %316 = vdwg.mxu0
    %v317 = vrcp.pop %v240
    %v318 = vmul.f32 1.0, %v317
    %v319 = vmul.f32 %v314, %v318
    %320 = vst.msk [vmem:[#allocation2] sm:$0xff] %vm155, %v319
    %321 = vrot.lane.b32.xlu0 %v139, 120
    %v322 = vpop.permute.xlu0 %321
    %323 = vrot.lane.b32.xlu0 %v139, 88
    %v324 = vpop.permute.xlu0 %323
    %v325 = vsel %vm155, %v322, 0
    %v327 = vsel %vm155, %v324, 0
    %329 = vmatprep.subr.mxu0 0.0
    %330 = vmatpush1.xpose.msra.mxu0 0.0
    %331 = vmatprep.subr.mxu0 0.0
    %332 = vmatpush1.xpose.msra.mxu0 0.0
    %333 = vmatprep.subr.mxu0 0.0
    %334 = vmatpush1.xpose.msra.mxu0 0.0
    %335 = vmatprep.subr.mxu0 0.0
    %336 = vmatpush1.xpose.msra.mxu0 0.0
    %337 = vmatprep.subr.mxu0 0.0
    %338 = vmatpush1.xpose.msra.mxu0 0.0
    %339 = vmatprep.subr.mxu0 0.0
    %340 = vmatpush1.xpose.msra.mxu0 0.0
    %341 = vmatprep.subr.mxu0 0.0
    %342 = vmatpush1.xpose.msra.mxu0 0.0
    %343 = vmatprep.subr.mxu0 0.0
    %344 = vmatpush1.xpose.msra.mxu0 0.0
    %345 = vmatprep.subr.mxu0 0.0
    %346 = vmatpush1.xpose.msra.mxu0 0.0
    %347 = vmatprep.subr.mxu0 0.0
    %348 = vmatpush1.xpose.msra.mxu0 0.0
    %349 = vmatprep.subr.mxu0 0.0
    %350 = vmatpush1.xpose.msra.mxu0 0.0
    %351 = vmatprep.subr.mxu0 0.0
    %352 = vmatpush1.xpose.msra.mxu0 0.0
    %353 = vmatprep.subr.mxu0 0.0
    %354 = vmatpush1.xpose.msra.mxu0 0.0
    %355 = vmatprep.subr.mxu0 0.0
    %356 = vmatpush1.xpose.msra.mxu0 0.0
    %357 = vmatprep.subr.mxu0 0.0
    %358 = vmatpush1.xpose.msra.mxu0 0.0
    %359 = vmatprep.subr.mxu0 0.0
    %360 = vmatpush1.xpose.msra.mxu0 %v327
    %361 = vmatprep.subr.mxu0 0.0
    %362 = vmatpush2.xpose.msra.mxu0 0.0
    %363 = vmatprep.subr.mxu0 0.0
    %364 = vmatpush2.xpose.msra.mxu0 0.0
    %365 = vmatprep.subr.mxu0 0.0
    %366 = vmatpush2.xpose.msra.mxu0 0.0
    %367 = vmatprep.subr.mxu0 0.0
    %368 = vmatpush2.xpose.msra.mxu0 0.0
    %369 = vmatprep.subr.mxu0 0.0
    %370 = vmatpush2.xpose.msra.mxu0 0.0
    %371 = vmatprep.subr.mxu0 0.0
    %372 = vmatpush2.xpose.msra.mxu0 0.0
    %373 = vmatprep.subr.mxu0 0.0
    %374 = vmatpush2.xpose.msra.mxu0 0.0
    %375 = vmatprep.subr.mxu0 0.0
    %376 = vmatpush2.xpose.msra.mxu0 0.0
    %377 = vmatprep.subr.mxu0 0.0
    %378 = vmatpush2.xpose.msra.mxu0 0.0
    %379 = vmatprep.subr.mxu0 0.0
    %380 = vmatpush2.xpose.msra.mxu0 0.0
    %381 = vmatprep.subr.mxu0 0.0
    %382 = vmatpush2.xpose.msra.mxu0 0.0
    %383 = vmatprep.subr.mxu0 0.0
    %384 = vmatpush2.xpose.msra.mxu0 0.0
    %385 = vmatprep.subr.mxu0 0.0
    %386 = vmatpush2.xpose.msra.mxu0 0.0
    %387 = vmatprep.subr.mxu0 0.0
    %388 = vmatpush2.xpose.msra.mxu0 0.0
    %389 = vmatprep.subr.mxu0 0.0
    %390 = vmatpush2.xpose.msra.mxu0 0.0
    %391 = vmatprep.subr.mxu0 0.0
    %392 = vmatpush2.xpose.msra.mxu0 0.0
    %393 = vmatprep.mubr.f32.mxu0 0.0
    %394 = vmatmul.mubr.f32.gmra.mxu0 %v325
    %v395 = vpop.f32.mrf.mxu0
    %v396 = vadd.f32 0.0, %v395
    %v397 = vpop.f32.mrf.mxu0
    %398 = vdwg.mxu0
    %v399 = vmul.f32 %v396, 0.35355338
    %v400 = vsel %vm151, %v399, -inf
    %v401 = vsel %vm155, %v400, -inf
    %402 = vmax.xlane.f32.xlu0 %v401
    %v403 = vpop.xlane.xlu0 %402
    %v404 = vsub.f32 %v400, %v403
    %v405 = vmul.f32 %v404, 1.442695
    %v406 = vpow.pop %v405
    %v407 = vsel %vm155, %v406, 0.0
    %408 = vadd.xlane.f32.xlu0 %v407
    %v409 = vpop.xlane.xlu0 %408
    %410 = vrot.lane.b32.xlu0 %v139, 56
    %v411 = vpop.permute.xlu0 %410
    %v414 = vsel %vm155, %v406, 0
    %416 = vmatprep.subr.mxu0 0.0
    %417 = vmatpush1.msra.mxu0 0.0
    %418 = vmatprep.subr.mxu0 0.0
    %419 = vmatpush1.msra.mxu0 0.0
    %420 = vmatprep.subr.mxu0 0.0
    %421 = vmatpush1.msra.mxu0 0.0
    %422 = vmatprep.subr.mxu0 0.0
    %423 = vmatpush1.msra.mxu0 0.0
    %424 = vmatprep.subr.mxu0 0.0
    %425 = vmatpush1.msra.mxu0 0.0
    %426 = vmatprep.subr.mxu0 0.0
    %427 = vmatpush1.msra.mxu0 0.0
    %428 = vmatprep.subr.mxu0 0.0
    %429 = vmatpush1.msra.mxu0 0.0
    %430 = vmatprep.subr.mxu0 0.0
    %431 = vmatpush1.msra.mxu0 0.0
    %432 = vmatprep.subr.mxu0 0.0
    %433 = vmatpush1.msra.mxu0 0.0
    %434 = vmatprep.subr.mxu0 0.0
    %435 = vmatpush1.msra.mxu0 0.0
    %436 = vmatprep.subr.mxu0 0.0
    %437 = vmatpush1.msra.mxu0 0.0
    %438 = vmatprep.subr.mxu0 0.0
    %439 = vmatpush1.msra.mxu0 0.0
    %440 = vmatprep.subr.mxu0 0.0
    %441 = vmatpush1.msra.mxu0 0.0
    %442 = vmatprep.subr.mxu0 0.0
    %443 = vmatpush1.msra.mxu0 0.0
    %444 = vmatprep.subr.mxu0 0.0
    %445 = vmatpush1.msra.mxu0 0.0
    %446 = vmatprep.subr.mxu0 0.0
    %447 = vmatpush1.msra.mxu0 %v411
    %448 = vmatprep.subr.mxu0 0.0
    %449 = vmatpush2.msra.mxu0 0.0
    %450 = vmatprep.subr.mxu0 0.0
    %451 = vmatpush2.msra.mxu0 0.0
    %452 = vmatprep.subr.mxu0 0.0
    %453 = vmatpush2.msra.mxu0 0.0
    %454 = vmatprep.subr.mxu0 0.0
    %455 = vmatpush2.msra.mxu0 0.0
    %456 = vmatprep.subr.mxu0 0.0
    %457 = vmatpush2.msra.mxu0 0.0
    %458 = vmatprep.subr.mxu0 0.0
    %459 = vmatpush2.msra.mxu0 0.0
    %460 = vmatprep.subr.mxu0 0.0
    %461 = vmatpush2.msra.mxu0 0.0
    %462 = vmatprep.subr.mxu0 0.0
    %463 = vmatpush2.msra.mxu0 0.0
    %464 = vmatprep.subr.mxu0 0.0
    %465 = vmatpush2.msra.mxu0 0.0
    %466 = vmatprep.subr.mxu0 0.0
    %467 = vmatpush2.msra.mxu0 0.0
    %468 = vmatprep.subr.mxu0 0.0
    %469 = vmatpush2.msra.mxu0 0.0
    %470 = vmatprep.subr.mxu0 0.0
    %471 = vmatpush2.msra.mxu0 0.0
    %472 = vmatprep.subr.mxu0 0.0
    %473 = vmatpush2.msra.mxu0 0.0
    %474 = vmatprep.subr.mxu0 0.0
    %475 = vmatpush2.msra.mxu0 0.0
    %476 = vmatprep.subr.mxu0 0.0
    %477 = vmatpush2.msra.mxu0 0.0
    %478 = vmatprep.subr.mxu0 0.0
    %479 = vmatpush2.msra.mxu0 0.0
    %480 = vmatprep.mubr.f32.mxu0 0.0
    %481 = vmatmul.mubr.f32.gmra.mxu0 %v414
    %v482 = vpop.f32.mrf.mxu0
    %v483 = vadd.f32 0.0, %v482
    %v484 = vpop.f32.mrf.mxu0
    %485 = vdwg.mxu0
    %v486 = vrcp.pop %v409
    %v487 = vmul.f32 1.0, %v486
    %v488 = vmul.f32 %v483, %v487
    %490 = vrot.lane.b32.xlu0 %v488, 8
    %v491 = vpop.permute.xlu0 %490
    %vm493 = vcmask 130112
    %494 = vst.msk [vmem:[#allocation2] sm:$0xff] %vm493, %v491
    %495 = vrot.lane.b32.xlu0 %v139, 112
    %v496 = vpop.permute.xlu0 %495
    %497 = vrot.lane.b32.xlu0 %v139, 80
    %v498 = vpop.permute.xlu0 %497
    %v499 = vsel %vm155, %v496, 0
    %v501 = vsel %vm155, %v498, 0
    %503 = vmatprep.subr.mxu0 0.0
    %504 = vmatpush1.xpose.msra.mxu0 0.0
    %505 = vmatprep.subr.mxu0 0.0
    %506 = vmatpush1.xpose.msra.mxu0 0.0
    %507 = vmatprep.subr.mxu0 0.0
    %508 = vmatpush1.xpose.msra.mxu0 0.0
    %509 = vmatprep.subr.mxu0 0.0
    %510 = vmatpush1.xpose.msra.mxu0 0.0
    %511 = vmatprep.subr.mxu0 0.0
    %512 = vmatpush1.xpose.msra.mxu0 0.0
    %513 = vmatprep.subr.mxu0 0.0
    %514 = vmatpush1.xpose.msra.mxu0 0.0
    %515 = vmatprep.subr.mxu0 0.0
    %516 = vmatpush1.xpose.msra.mxu0 0.0
    %517 = vmatprep.subr.mxu0 0.0
    %518 = vmatpush1.xpose.msra.mxu0 0.0
    %519 = vmatprep.subr.mxu0 0.0
    %520 = vmatpush1.xpose.msra.mxu0 0.0
    %521 = vmatprep.subr.mxu0 0.0
    %522 = vmatpush1.xpose.msra.mxu0 0.0
    %523 = vmatprep.subr.mxu0 0.0
    %524 = vmatpush1.xpose.msra.mxu0 0.0
    %525 = vmatprep.subr.mxu0 0.0
    %526 = vmatpush1.xpose.msra.mxu0 0.0
    %527 = vmatprep.subr.mxu0 0.0
    %528 = vmatpush1.xpose.msra.mxu0 0.0
    %529 = vmatprep.subr.mxu0 0.0
    %530 = vmatpush1.xpose.msra.mxu0 0.0
    %531 = vmatprep.subr.mxu0 0.0
    %532 = vmatpush1.xpose.msra.mxu0 0.0
    %533 = vmatprep.subr.mxu0 0.0
    %534 = vmatpush1.xpose.msra.mxu0 %v501
    %535 = vmatprep.subr.mxu0 0.0
    %536 = vmatpush2.xpose.msra.mxu0 0.0
    %537 = vmatprep.subr.mxu0 0.0
    %538 = vmatpush2.xpose.msra.mxu0 0.0
    %539 = vmatprep.subr.mxu0 0.0
    %540 = vmatpush2.xpose.msra.mxu0 0.0
    %541 = vmatprep.subr.mxu0 0.0
    %542 = vmatpush2.xpose.msra.mxu0 0.0
    %543 = vmatprep.subr.mxu0 0.0
    %544 = vmatpush2.xpose.msra.mxu0 0.0
    %545 = vmatprep.subr.mxu0 0.0
    %546 = vmatpush2.xpose.msra.mxu0 0.0
    %547 = vmatprep.subr.mxu0 0.0
    %548 = vmatpush2.xpose.msra.mxu0 0.0
    %549 = vmatprep.subr.mxu0 0.0
    %550 = vmatpush2.xpose.msra.mxu0 0.0
    %551 = vmatprep.subr.mxu0 0.0
    %552 = vmatpush2.xpose.msra.mxu0 0.0
    %553 = vmatprep.subr.mxu0 0.0
    %554 = vmatpush2.xpose.msra.mxu0 0.0
    %555 = vmatprep.subr.mxu0 0.0
    %556 = vmatpush2.xpose.msra.mxu0 0.0
    %557 = vmatprep.subr.mxu0 0.0
    %558 = vmatpush2.xpose.msra.mxu0 0.0
    %559 = vmatprep.subr.mxu0 0.0
    %560 = vmatpush2.xpose.msra.mxu0 0.0
    %561 = vmatprep.subr.mxu0 0.0
    %562 = vmatpush2.xpose.msra.mxu0 0.0
    %563 = vmatprep.subr.mxu0 0.0
    %564 = vmatpush2.xpose.msra.mxu0 0.0
    %565 = vmatprep.subr.mxu0 0.0
    %566 = vmatpush2.xpose.msra.mxu0 0.0
    %567 = vmatprep.mubr.f32.mxu0 0.0
    %568 = vmatmul.mubr.f32.gmra.mxu0 %v499
    %v569 = vpop.f32.mrf.mxu0
    %v570 = vadd.f32 0.0, %v569
    %v571 = vpop.f32.mrf.mxu0
    %572 = vdwg.mxu0
    %v573 = vmul.f32 %v570, 0.35355338
    %v574 = vsel %vm151, %v573, -inf
    %v575 = vsel %vm155, %v574, -inf
    %576 = vmax.xlane.f32.xlu0 %v575
    %v577 = vpop.xlane.xlu0 %576
    %v578 = vsub.f32 %v574, %v577
    %v579 = vmul.f32 %v578, 1.442695
    %v580 = vpow.pop %v579
    %v581 = vsel %vm155, %v580, 0.0
    %582 = vadd.xlane.f32.xlu0 %v581
    %v583 = vpop.xlane.xlu0 %582
    %584 = vrot.lane.b32.xlu0 %v139, 48
    %v585 = vpop.permute.xlu0 %584
    %v588 = vsel %vm155, %v580, 0
    %590 = vmatprep.subr.mxu0 0.0
    %591 = vmatpush1.msra.mxu0 0.0
    %592 = vmatprep.subr.mxu0 0.0
    %593 = vmatpush1.msra.mxu0 0.0
    %594 = vmatprep.subr.mxu0 0.0
    %595 = vmatpush1.msra.mxu0 0.0
    %596 = vmatprep.subr.mxu0 0.0
    %597 = vmatpush1.msra.mxu0 0.0
    %598 = vmatprep.subr.mxu0 0.0
    %599 = vmatpush1.msra.mxu0 0.0
    %600 = vmatprep.subr.mxu0 0.0
    %601 = vmatpush1.msra.mxu0 0.0
    %602 = vmatprep.subr.mxu0 0.0
    %603 = vmatpush1.msra.mxu0 0.0
    %604 = vmatprep.subr.mxu0 0.0
    %605 = vmatpush1.msra.mxu0 0.0
    %606 = vmatprep.subr.mxu0 0.0
    %607 = vmatpush1.msra.mxu0 0.0
    %608 = vmatprep.subr.mxu0 0.0
    %609 = vmatpush1.msra.mxu0 0.0
    %610 = vmatprep.subr.mxu0 0.0
    %611 = vmatpush1.msra.mxu0 0.0
    %612 = vmatprep.subr.mxu0 0.0
    %613 = vmatpush1.msra.mxu0 0.0
    %614 = vmatprep.subr.mxu0 0.0
    %615 = vmatpush1.msra.mxu0 0.0
    %616 = vmatprep.subr.mxu0 0.0
    %617 = vmatpush1.msra.mxu0 0.0
    %618 = vmatprep.subr.mxu0 0.0
    %619 = vmatpush1.msra.mxu0 0.0
    %620 = vmatprep.subr.mxu0 0.0
    %621 = vmatpush1.msra.mxu0 %v585
    %622 = vmatprep.subr.mxu0 0.0
    %623 = vmatpush2.msra.mxu0 0.0
    %624 = vmatprep.subr.mxu0 0.0
    %625 = vmatpush2.msra.mxu0 0.0
    %626 = vmatprep.subr.mxu0 0.0
    %627 = vmatpush2.msra.mxu0 0.0
    %628 = vmatprep.subr.mxu0 0.0
    %629 = vmatpush2.msra.mxu0 0.0
    %630 = vmatprep.subr.mxu0 0.0
    %631 = vmatpush2.msra.mxu0 0.0
    %632 = vmatprep.subr.mxu0 0.0
    %633 = vmatpush2.msra.mxu0 0.0
    %634 = vmatprep.subr.mxu0 0.0
    %635 = vmatpush2.msra.mxu0 0.0
    %636 = vmatprep.subr.mxu0 0.0
    %637 = vmatpush2.msra.mxu0 0.0
    %638 = vmatprep.subr.mxu0 0.0
    %639 = vmatpush2.msra.mxu0 0.0
    %640 = vmatprep.subr.mxu0 0.0
    %641 = vmatpush2.msra.mxu0 0.0
    %642 = vmatprep.subr.mxu0 0.0
    %643 = vmatpush2.msra.mxu0 0.0
    %644 = vmatprep.subr.mxu0 0.0
    %645 = vmatpush2.msra.mxu0 0.0
    %646 = vmatprep.subr.mxu0 0.0
    %647 = vmatpush2.msra.mxu0 0.0
    %648 = vmatprep.subr.mxu0 0.0
    %649 = vmatpush2.msra.mxu0 0.0
    %650 = vmatprep.subr.mxu0 0.0
    %651 = vmatpush2.msra.mxu0 0.0
    %652 = vmatprep.subr.mxu0 0.0
    %653 = vmatpush2.msra.mxu0 0.0
    %654 = vmatprep.mubr.f32.mxu0 0.0
    %655 = vmatmul.mubr.f32.gmra.mxu0 %v588
    %v656 = vpop.f32.mrf.mxu0
    %v657 = vadd.f32 0.0, %v656
    %v658 = vpop.f32.mrf.mxu0
    %659 = vdwg.mxu0
    %v660 = vrcp.pop %v583
    %v661 = vmul.f32 1.0, %v660
    %v662 = vmul.f32 %v657, %v661
    %664 = vrot.lane.b32.xlu0 %v662, 16
    %v665 = vpop.permute.xlu0 %664
    %vm667 = vcmask 195712
    %668 = vst.msk [vmem:[#allocation2] sm:$0xff] %vm667, %v665
    %669 = vrot.lane.b32.xlu0 %v139, 104
    %v670 = vpop.permute.xlu0 %669
    %671 = vrot.lane.b32.xlu0 %v139, 72
    %v672 = vpop.permute.xlu0 %671
    %v673 = vsel %vm155, %v670, 0
    %v675 = vsel %vm155, %v672, 0
    %677 = vmatprep.subr.mxu0 0.0
    %678 = vmatpush1.xpose.msra.mxu0 0.0
    %679 = vmatprep.subr.mxu0 0.0
    %680 = vmatpush1.xpose.msra.mxu0 0.0
    %681 = vmatprep.subr.mxu0 0.0
    %682 = vmatpush1.xpose.msra.mxu0 0.0
    %683 = vmatprep.subr.mxu0 0.0
    %684 = vmatpush1.xpose.msra.mxu0 0.0
    %685 = vmatprep.subr.mxu0 0.0
    %686 = vmatpush1.xpose.msra.mxu0 0.0
    %687 = vmatprep.subr.mxu0 0.0
    %688 = vmatpush1.xpose.msra.mxu0 0.0
    %689 = vmatprep.subr.mxu0 0.0
    %690 = vmatpush1.xpose.msra.mxu0 0.0
    %691 = vmatprep.subr.mxu0 0.0
    %692 = vmatpush1.xpose.msra.mxu0 0.0
    %693 = vmatprep.subr.mxu0 0.0
    %694 = vmatpush1.xpose.msra.mxu0 0.0
    %695 = vmatprep.subr.mxu0 0.0
    %696 = vmatpush1.xpose.msra.mxu0 0.0
    %697 = vmatprep.subr.mxu0 0.0
    %698 = vmatpush1.xpose.msra.mxu0 0.0
    %699 = vmatprep.subr.mxu0 0.0
    %700 = vmatpush1.xpose.msra.mxu0 0.0
    %701 = vmatprep.subr.mxu0 0.0
    %702 = vmatpush1.xpose.msra.mxu0 0.0
    %703 = vmatprep.subr.mxu0 0.0
    %704 = vmatpush1.xpose.msra.mxu0 0.0
    %705 = vmatprep.subr.mxu0 0.0
    %706 = vmatpush1.xpose.msra.mxu0 0.0
    %707 = vmatprep.subr.mxu0 0.0
    %708 = vmatpush1.xpose.msra.mxu0 %v675
    %709 = vmatprep.subr.mxu0 0.0
    %710 = vmatpush2.xpose.msra.mxu0 0.0
    %711 = vmatprep.subr.mxu0 0.0
    %712 = vmatpush2.xpose.msra.mxu0 0.0
    %713 = vmatprep.subr.mxu0 0.0
    %714 = vmatpush2.xpose.msra.mxu0 0.0
    %715 = vmatprep.subr.mxu0 0.0
    %716 = vmatpush2.xpose.msra.mxu0 0.0
    %717 = vmatprep.subr.mxu0 0.0
    %718 = vmatpush2.xpose.msra.mxu0 0.0
    %719 = vmatprep.subr.mxu0 0.0
    %720 = vmatpush2.xpose.msra.mxu0 0.0
    %721 = vmatprep.subr.mxu0 0.0
    %722 = vmatpush2.xpose.msra.mxu0 0.0
    %723 = vmatprep.subr.mxu0 0.0
    %724 = vmatpush2.xpose.msra.mxu0 0.0
    %725 = vmatprep.subr.mxu0 0.0
    %726 = vmatpush2.xpose.msra.mxu0 0.0
    %727 = vmatprep.subr.mxu0 0.0
    %728 = vmatpush2.xpose.msra.mxu0 0.0
    %729 = vmatprep.subr.mxu0 0.0
    %730 = vmatpush2.xpose.msra.mxu0 0.0
    %731 = vmatprep.subr.mxu0 0.0
    %732 = vmatpush2.xpose.msra.mxu0 0.0
    %733 = vmatprep.subr.mxu0 0.0
    %734 = vmatpush2.xpose.msra.mxu0 0.0
    %735 = vmatprep.subr.mxu0 0.0
    %736 = vmatpush2.xpose.msra.mxu0 0.0
    %737 = vmatprep.subr.mxu0 0.0
    %738 = vmatpush2.xpose.msra.mxu0 0.0
    %739 = vmatprep.subr.mxu0 0.0
    %740 = vmatpush2.xpose.msra.mxu0 0.0
    %741 = vmatprep.mubr.f32.mxu0 0.0
    %742 = vmatmul.mubr.f32.gmra.mxu0 %v673
    %v743 = vpop.f32.mrf.mxu0
    %v744 = vadd.f32 0.0, %v743
    %v745 = vpop.f32.mrf.mxu0
    %746 = vdwg.mxu0
    %v747 = vmul.f32 %v744, 0.35355338
    %v748 = vsel %vm151, %v747, -inf
    %v749 = vsel %vm155, %v748, -inf
    %750 = vmax.xlane.f32.xlu0 %v749
    %v751 = vpop.xlane.xlu0 %750
    %v752 = vsub.f32 %v748, %v751
    %v753 = vmul.f32 %v752, 1.442695
    %v754 = vpow.pop %v753
    %v755 = vsel %vm155, %v754, 0.0
    %756 = vadd.xlane.f32.xlu0 %v755
    %v757 = vpop.xlane.xlu0 %756
    %758 = vrot.lane.b32.xlu0 %v139, 40
    %v759 = vpop.permute.xlu0 %758
    %v762 = vsel %vm155, %v754, 0
    %764 = vmatprep.subr.mxu0 0.0
    %765 = vmatpush1.msra.mxu0 0.0
    %766 = vmatprep.subr.mxu0 0.0
    %767 = vmatpush1.msra.mxu0 0.0
    %768 = vmatprep.subr.mxu0 0.0
    %769 = vmatpush1.msra.mxu0 0.0
    %770 = vmatprep.subr.mxu0 0.0
    %771 = vmatpush1.msra.mxu0 0.0
    %772 = vmatprep.subr.mxu0 0.0
    %773 = vmatpush1.msra.mxu0 0.0
    %774 = vmatprep.subr.mxu0 0.0
    %775 = vmatpush1.msra.mxu0 0.0
    %776 = vmatprep.subr.mxu0 0.0
    %777 = vmatpush1.msra.mxu0 0.0
    %778 = vmatprep.subr.mxu0 0.0
    %779 = vmatpush1.msra.mxu0 0.0
    %780 = vmatprep.subr.mxu0 0.0
    %781 = vmatpush1.msra.mxu0 0.0
    %782 = vmatprep.subr.mxu0 0.0
    %783 = vmatpush1.msra.mxu0 0.0
    %784 = vmatprep.subr.mxu0 0.0
    %785 = vmatpush1.msra.mxu0 0.0
    %786 = vmatprep.subr.mxu0 0.0
    %787 = vmatpush1.msra.mxu0 0.0
    %788 = vmatprep.subr.mxu0 0.0
    %789 = vmatpush1.msra.mxu0 0.0
    %790 = vmatprep.subr.mxu0 0.0
    %791 = vmatpush1.msra.mxu0 0.0
    %792 = vmatprep.subr.mxu0 0.0
    %793 = vmatpush1.msra.mxu0 0.0
    %794 = vmatprep.subr.mxu0 0.0
    %795 = vmatpush1.msra.mxu0 %v759
    %796 = vmatprep.subr.mxu0 0.0
    %797 = vmatpush2.msra.mxu0 0.0
    %798 = vmatprep.subr.mxu0 0.0
    %799 = vmatpush2.msra.mxu0 0.0
    %800 = vmatprep.subr.mxu0 0.0
    %801 = vmatpush2.msra.mxu0 0.0
    %802 = vmatprep.subr.mxu0 0.0
    %803 = vmatpush2.msra.mxu0 0.0
    %804 = vmatprep.subr.mxu0 0.0
    %805 = vmatpush2.msra.mxu0 0.0
    %806 = vmatprep.subr.mxu0 0.0
    %807 = vmatpush2.msra.mxu0 0.0
    %808 = vmatprep.subr.mxu0 0.0
    %809 = vmatpush2.msra.mxu0 0.0
    %810 = vmatprep.subr.mxu0 0.0
    %811 = vmatpush2.msra.mxu0 0.0
    %812 = vmatprep.subr.mxu0 0.0
    %813 = vmatpush2.msra.mxu0 0.0
    %814 = vmatprep.subr.mxu0 0.0
    %815 = vmatpush2.msra.mxu0 0.0
    %816 = vmatprep.subr.mxu0 0.0
    %817 = vmatpush2.msra.mxu0 0.0
    %818 = vmatprep.subr.mxu0 0.0
    %819 = vmatpush2.msra.mxu0 0.0
    %820 = vmatprep.subr.mxu0 0.0
    %821 = vmatpush2.msra.mxu0 0.0
    %822 = vmatprep.subr.mxu0 0.0
    %823 = vmatpush2.msra.mxu0 0.0
    %824 = vmatprep.subr.mxu0 0.0
    %825 = vmatpush2.msra.mxu0 0.0
    %826 = vmatprep.subr.mxu0 0.0
    %827 = vmatpush2.msra.mxu0 0.0
    %828 = vmatprep.mubr.f32.mxu0 0.0
    %829 = vmatmul.mubr.f32.gmra.mxu0 %v762
    %v830 = vpop.f32.mrf.mxu0
    %v831 = vadd.f32 0.0, %v830
    %v832 = vpop.f32.mrf.mxu0
    %833 = vdwg.mxu0
    %v834 = vrcp.pop %v757
    %v835 = vmul.f32 1.0, %v834
    %v836 = vmul.f32 %v831, %v835
    %838 = vrot.lane.b32.xlu0 %v836, 24
    %v839 = vpop.permute.xlu0 %838
    %vm841 = vcmask 261312
    %842 = vst.msk [vmem:[#allocation2] sm:$0xff] %vm841, %v839
    %844 = vrot.lane.b32.xlu0 %v144, 96
    %v845 = vpop.permute.xlu0 %844
    %v846 = vsel %vm155, %v144, 0
    %v848 = vsel %vm155, %v845, 0
    %850 = vmatprep.subr.mxu0 0.0
    %851 = vmatpush1.xpose.msra.mxu0 0.0
    %852 = vmatprep.subr.mxu0 0.0
    %853 = vmatpush1.xpose.msra.mxu0 0.0
    %854 = vmatprep.subr.mxu0 0.0
    %855 = vmatpush1.xpose.msra.mxu0 0.0
    %856 = vmatprep.subr.mxu0 0.0
    %857 = vmatpush1.xpose.msra.mxu0 0.0
    %858 = vmatprep.subr.mxu0 0.0
    %859 = vmatpush1.xpose.msra.mxu0 0.0
    %860 = vmatprep.subr.mxu0 0.0
    %861 = vmatpush1.xpose.msra.mxu0 0.0
    %862 = vmatprep.subr.mxu0 0.0
    %863 = vmatpush1.xpose.msra.mxu0 0.0
    %864 = vmatprep.subr.mxu0 0.0
    %865 = vmatpush1.xpose.msra.mxu0 0.0
    %866 = vmatprep.subr.mxu0 0.0
    %867 = vmatpush1.xpose.msra.mxu0 0.0
    %868 = vmatprep.subr.mxu0 0.0
    %869 = vmatpush1.xpose.msra.mxu0 0.0
    %870 = vmatprep.subr.mxu0 0.0
    %871 = vmatpush1.xpose.msra.mxu0 0.0
    %872 = vmatprep.subr.mxu0 0.0
    %873 = vmatpush1.xpose.msra.mxu0 0.0
    %874 = vmatprep.subr.mxu0 0.0
    %875 = vmatpush1.xpose.msra.mxu0 0.0
    %876 = vmatprep.subr.mxu0 0.0
    %877 = vmatpush1.xpose.msra.mxu0 0.0
    %878 = vmatprep.subr.mxu0 0.0
    %879 = vmatpush1.xpose.msra.mxu0 0.0
    %880 = vmatprep.subr.mxu0 0.0
    %881 = vmatpush1.xpose.msra.mxu0 %v848
    %882 = vmatprep.subr.mxu0 0.0
    %883 = vmatpush2.xpose.msra.mxu0 0.0
    %884 = vmatprep.subr.mxu0 0.0
    %885 = vmatpush2.xpose.msra.mxu0 0.0
    %886 = vmatprep.subr.mxu0 0.0
    %887 = vmatpush2.xpose.msra.mxu0 0.0
    %888 = vmatprep.subr.mxu0 0.0
    %889 = vmatpush2.xpose.msra.mxu0 0.0
    %890 = vmatprep.subr.mxu0 0.0
    %891 = vmatpush2.xpose.msra.mxu0 0.0
    %892 = vmatprep.subr.mxu0 0.0
    %893 = vmatpush2.xpose.msra.mxu0 0.0
    %894 = vmatprep.subr.mxu0 0.0
    %895 = vmatpush2.xpose.msra.mxu0 0.0
    %896 = vmatprep.subr.mxu0 0.0
    %897 = vmatpush2.xpose.msra.mxu0 0.0
    %898 = vmatprep.subr.mxu0 0.0
    %899 = vmatpush2.xpose.msra.mxu0 0.0
    %900 = vmatprep.subr.mxu0 0.0
    %901 = vmatpush2.xpose.msra.mxu0 0.0
    %902 = vmatprep.subr.mxu0 0.0
    %903 = vmatpush2.xpose.msra.mxu0 0.0
    %904 = vmatprep.subr.mxu0 0.0
    %905 = vmatpush2.xpose.msra.mxu0 0.0
    %906 = vmatprep.subr.mxu0 0.0
    %907 = vmatpush2.xpose.msra.mxu0 0.0
    %908 = vmatprep.subr.mxu0 0.0
    %909 = vmatpush2.xpose.msra.mxu0 0.0
    %910 = vmatprep.subr.mxu0 0.0
    %911 = vmatpush2.xpose.msra.mxu0 0.0
    %912 = vmatprep.subr.mxu0 0.0
    %913 = vmatpush2.xpose.msra.mxu0 0.0
    %914 = vmatprep.mubr.f32.mxu0 0.0
    %915 = vmatmul.mubr.f32.gmra.mxu0 %v846
    %v916 = vpop.f32.mrf.mxu0
    %v917 = vadd.f32 0.0, %v916
    %v918 = vpop.f32.mrf.mxu0
    %919 = vdwg.mxu0
    %v920 = vmul.f32 %v917, 0.35355338
    %v921 = vsel %vm151, %v920, -inf
    %v922 = vsel %vm155, %v921, -inf
    %923 = vmax.xlane.f32.xlu0 %v922
    %v924 = vpop.xlane.xlu0 %923
    %v925 = vsub.f32 %v921, %v924
    %v926 = vmul.f32 %v925, 1.442695
    %v927 = vpow.pop %v926
    %v928 = vsel %vm155, %v927, 0.0
    %929 = vadd.xlane.f32.xlu0 %v928
    %v930 = vpop.xlane.xlu0 %929
    %931 = vrot.lane.b32.xlu0 %v144, 64
    %v932 = vpop.permute.xlu0 %931
    %v935 = vsel %vm155, %v927, 0
    %937 = vmatprep.subr.mxu0 0.0
    %938 = vmatpush1.msra.mxu0 0.0
    %939 = vmatprep.subr.mxu0 0.0
    %940 = vmatpush1.msra.mxu0 0.0
    %941 = vmatprep.subr.mxu0 0.0
    %942 = vmatpush1.msra.mxu0 0.0
    %943 = vmatprep.subr.mxu0 0.0
    %944 = vmatpush1.msra.mxu0 0.0
    %945 = vmatprep.subr.mxu0 0.0
    %946 = vmatpush1.msra.mxu0 0.0
    %947 = vmatprep.subr.mxu0 0.0
    %948 = vmatpush1.msra.mxu0 0.0
    %949 = vmatprep.subr.mxu0 0.0
    %950 = vmatpush1.msra.mxu0 0.0
    %951 = vmatprep.subr.mxu0 0.0
    %952 = vmatpush1.msra.mxu0 0.0
    %953 = vmatprep.subr.mxu0 0.0
    %954 = vmatpush1.msra.mxu0 0.0
    %955 = vmatprep.subr.mxu0 0.0
    %956 = vmatpush1.msra.mxu0 0.0
    %957 = vmatprep.subr.mxu0 0.0
    %958 = vmatpush1.msra.mxu0 0.0
    %959 = vmatprep.subr.mxu0 0.0
    %960 = vmatpush1.msra.mxu0 0.0
    %961 = vmatprep.subr.mxu0 0.0
    %962 = vmatpush1.msra.mxu0 0.0
    %963 = vmatprep.subr.mxu0 0.0
    %964 = vmatpush1.msra.mxu0 0.0
    %965 = vmatprep.subr.mxu0 0.0
    %966 = vmatpush1.msra.mxu0 0.0
    %967 = vmatprep.subr.mxu0 0.0
    %968 = vmatpush1.msra.mxu0 %v932
    %969 = vmatprep.subr.mxu0 0.0
    %970 = vmatpush2.msra.mxu0 0.0
    %971 = vmatprep.subr.mxu0 0.0
    %972 = vmatpush2.msra.mxu0 0.0
    %973 = vmatprep.subr.mxu0 0.0
    %974 = vmatpush2.msra.mxu0 0.0
    %975 = vmatprep.subr.mxu0 0.0
    %976 = vmatpush2.msra.mxu0 0.0
    %977 = vmatprep.subr.mxu0 0.0
    %978 = vmatpush2.msra.mxu0 0.0
    %979 = vmatprep.subr.mxu0 0.0
    %980 = vmatpush2.msra.mxu0 0.0
    %981 = vmatprep.subr.mxu0 0.0
    %982 = vmatpush2.msra.mxu0 0.0
    %983 = vmatprep.subr.mxu0 0.0
    %984 = vmatpush2.msra.mxu0 0.0
    %985 = vmatprep.subr.mxu0 0.0
    %986 = vmatpush2.msra.mxu0 0.0
    %987 = vmatprep.subr.mxu0 0.0
    %988 = vmatpush2.msra.mxu0 0.0
    %989 = vmatprep.subr.mxu0 0.0
    %990 = vmatpush2.msra.mxu0 0.0
    %991 = vmatprep.subr.mxu0 0.0
    %992 = vmatpush2.msra.mxu0 0.0
    %993 = vmatprep.subr.mxu0 0.0
    %994 = vmatpush2.msra.mxu0 0.0
    %995 = vmatprep.subr.mxu0 0.0
    %996 = vmatpush2.msra.mxu0 0.0
    %997 = vmatprep.subr.mxu0 0.0
    %998 = vmatpush2.msra.mxu0 0.0
    %999 = vmatprep.subr.mxu0 0.0
    %1000 = vmatpush2.msra.mxu0 0.0
    %1001 = vmatprep.mubr.f32.mxu0 0.0
    %1002 = vmatmul.mubr.f32.gmra.mxu0 %v935
    %v1003 = vpop.f32.mrf.mxu0
    %v1004 = vadd.f32 0.0, %v1003
    %v1005 = vpop.f32.mrf.mxu0
    %1006 = vdwg.mxu0
    %v1007 = vrcp.pop %v930
    %v1008 = vmul.f32 1.0, %v1007
    %v1009 = vmul.f32 %v1004, %v1008
    %1010 = vst.msk [vmem:[#allocation2 + $0x8] sm:$0xff] %vm155, %v1009
    %1011 = vrot.lane.b32.xlu0 %v144, 120
    %v1012 = vpop.permute.xlu0 %1011
    %1013 = vrot.lane.b32.xlu0 %v144, 88
    %v1014 = vpop.permute.xlu0 %1013
    %v1015 = vsel %vm155, %v1012, 0
    %v1017 = vsel %vm155, %v1014, 0
    %1019 = vmatprep.subr.mxu0 0.0
    %1020 = vmatpush1.xpose.msra.mxu0 0.0
    %1021 = vmatprep.subr.mxu0 0.0
    %1022 = vmatpush1.xpose.msra.mxu0 0.0
    %1023 = vmatprep.subr.mxu0 0.0
    %1024 = vmatpush1.xpose.msra.mxu0 0.0
    %1025 = vmatprep.subr.mxu0 0.0
    %1026 = vmatpush1.xpose.msra.mxu0 0.0
    %1027 = vmatprep.subr.mxu0 0.0
    %1028 = vmatpush1.xpose.msra.mxu0 0.0
    %1029 = vmatprep.subr.mxu0 0.0
    %1030 = vmatpush1.xpose.msra.mxu0 0.0
    %1031 = vmatprep.subr.mxu0 0.0
    %1032 = vmatpush1.xpose.msra.mxu0 0.0
    %1033 = vmatprep.subr.mxu0 0.0
    %1034 = vmatpush1.xpose.msra.mxu0 0.0
    %1035 = vmatprep.subr.mxu0 0.0
    %1036 = vmatpush1.xpose.msra.mxu0 0.0
    %1037 = vmatprep.subr.mxu0 0.0
    %1038 = vmatpush1.xpose.msra.mxu0 0.0
    %1039 = vmatprep.subr.mxu0 0.0
    %1040 = vmatpush1.xpose.msra.mxu0 0.0
    %1041 = vmatprep.subr.mxu0 0.0
    %1042 = vmatpush1.xpose.msra.mxu0 0.0
    %1043 = vmatprep.subr.mxu0 0.0
    %1044 = vmatpush1.xpose.msra.mxu0 0.0
    %1045 = vmatprep.subr.mxu0 0.0
    %1046 = vmatpush1.xpose.msra.mxu0 0.0
    %1047 = vmatprep.subr.mxu0 0.0
    %1048 = vmatpush1.xpose.msra.mxu0 0.0
    %1049 = vmatprep.subr.mxu0 0.0
    %1050 = vmatpush1.xpose.msra.mxu0 %v1017
    %1051 = vmatprep.subr.mxu0 0.0
    %1052 = vmatpush2.xpose.msra.mxu0 0.0
    %1053 = vmatprep.subr.mxu0 0.0
    %1054 = vmatpush2.xpose.msra.mxu0 0.0
    %1055 = vmatprep.subr.mxu0 0.0
    %1056 = vmatpush2.xpose.msra.mxu0 0.0
    %1057 = vmatprep.subr.mxu0 0.0
    %1058 = vmatpush2.xpose.msra.mxu0 0.0
    %1059 = vmatprep.subr.mxu0 0.0
    %1060 = vmatpush2.xpose.msra.mxu0 0.0
    %1061 = vmatprep.subr.mxu0 0.0
    %1062 = vmatpush2.xpose.msra.mxu0 0.0
    %1063 = vmatprep.subr.mxu0 0.0
    %1064 = vmatpush2.xpose.msra.mxu0 0.0
    %1065 = vmatprep.subr.mxu0 0.0
    %1066 = vmatpush2.xpose.msra.mxu0 0.0
    %1067 = vmatprep.subr.mxu0 0.0
    %1068 = vmatpush2.xpose.msra.mxu0 0.0
    %1069 = vmatprep.subr.mxu0 0.0
    %1070 = vmatpush2.xpose.msra.mxu0 0.0
    %1071 = vmatprep.subr.mxu0 0.0
    %1072 = vmatpush2.xpose.msra.mxu0 0.0
    %1073 = vmatprep.subr.mxu0 0.0
    %1074 = vmatpush2.xpose.msra.mxu0 0.0
    %1075 = vmatprep.subr.mxu0 0.0
    %1076 = vmatpush2.xpose.msra.mxu0 0.0
    %1077 = vmatprep.subr.mxu0 0.0
    %1078 = vmatpush2.xpose.msra.mxu0 0.0
    %1079 = vmatprep.subr.mxu0 0.0
    %1080 = vmatpush2.xpose.msra.mxu0 0.0
    %1081 = vmatprep.subr.mxu0 0.0
    %1082 = vmatpush2.xpose.msra.mxu0 0.0
    %1083 = vmatprep.mubr.f32.mxu0 0.0
    %1084 = vmatmul.mubr.f32.gmra.mxu0 %v1015
    %v1085 = vpop.f32.mrf.mxu0
    %v1086 = vadd.f32 0.0, %v1085
    %v1087 = vpop.f32.mrf.mxu0
    %1088 = vdwg.mxu0
    %v1089 = vmul.f32 %v1086, 0.35355338
    %v1090 = vsel %vm151, %v1089, -inf
    %v1091 = vsel %vm155, %v1090, -inf
    %1092 = vmax.xlane.f32.xlu0 %v1091
    %v1093 = vpop.xlane.xlu0 %1092
    %v1094 = vsub.f32 %v1090, %v1093
    %v1095 = vmul.f32 %v1094, 1.442695
    %v1096 = vpow.pop %v1095
    %v1097 = vsel %vm155, %v1096, 0.0
    %1098 = vadd.xlane.f32.xlu0 %v1097
    %v1099 = vpop.xlane.xlu0 %1098
    %1100 = vrot.lane.b32.xlu0 %v144, 56
    %v1101 = vpop.permute.xlu0 %1100
    %v1104 = vsel %vm155, %v1096, 0
    %1106 = vmatprep.subr.mxu0 0.0
    %1107 = vmatpush1.msra.mxu0 0.0
    %1108 = vmatprep.subr.mxu0 0.0
    %1109 = vmatpush1.msra.mxu0 0.0
    %1110 = vmatprep.subr.mxu0 0.0
    %1111 = vmatpush1.msra.mxu0 0.0
    %1112 = vmatprep.subr.mxu0 0.0
    %1113 = vmatpush1.msra.mxu0 0.0
    %1114 = vmatprep.subr.mxu0 0.0
    %1115 = vmatpush1.msra.mxu0 0.0
    %1116 = vmatprep.subr.mxu0 0.0
    %1117 = vmatpush1.msra.mxu0 0.0
    %1118 = vmatprep.subr.mxu0 0.0
    %1119 = vmatpush1.msra.mxu0 0.0
    %1120 = vmatprep.subr.mxu0 0.0
    %1121 = vmatpush1.msra.mxu0 0.0
    %1122 = vmatprep.subr.mxu0 0.0
    %1123 = vmatpush1.msra.mxu0 0.0
    %1124 = vmatprep.subr.mxu0 0.0
    %1125 = vmatpush1.msra.mxu0 0.0
    %1126 = vmatprep.subr.mxu0 0.0
    %1127 = vmatpush1.msra.mxu0 0.0
    %1128 = vmatprep.subr.mxu0 0.0
    %1129 = vmatpush1.msra.mxu0 0.0
    %1130 = vmatprep.subr.mxu0 0.0
    %1131 = vmatpush1.msra.mxu0 0.0
    %1132 = vmatprep.subr.mxu0 0.0
    %1133 = vmatpush1.msra.mxu0 0.0
    %1134 = vmatprep.subr.mxu0 0.0
    %1135 = vmatpush1.msra.mxu0 0.0
    %1136 = vmatprep.subr.mxu0 0.0
    %1137 = vmatpush1.msra.mxu0 %v1101
    %1138 = vmatprep.subr.mxu0 0.0
    %1139 = vmatpush2.msra.mxu0 0.0
    %1140 = vmatprep.subr.mxu0 0.0
    %1141 = vmatpush2.msra.mxu0 0.0
    %1142 = vmatprep.subr.mxu0 0.0
    %1143 = vmatpush2.msra.mxu0 0.0
    %1144 = vmatprep.subr.mxu0 0.0
    %1145 = vmatpush2.msra.mxu0 0.0
    %1146 = vmatprep.subr.mxu0 0.0
    %1147 = vmatpush2.msra.mxu0 0.0
    %1148 = vmatprep.subr.mxu0 0.0
    %1149 = vmatpush2.msra.mxu0 0.0
    %1150 = vmatprep.subr.mxu0 0.0
    %1151 = vmatpush2.msra.mxu0 0.0
    %1152 = vmatprep.subr.mxu0 0.0
    %1153 = vmatpush2.msra.mxu0 0.0
    %1154 = vmatprep.subr.mxu0 0.0
    %1155 = vmatpush2.msra.mxu0 0.0
    %1156 = vmatprep.subr.mxu0 0.0
    %1157 = vmatpush2.msra.mxu0 0.0
    %1158 = vmatprep.subr.mxu0 0.0
    %1159 = vmatpush2.msra.mxu0 0.0
    %1160 = vmatprep.subr.mxu0 0.0
    %1161 = vmatpush2.msra.mxu0 0.0
    %1162 = vmatprep.subr.mxu0 0.0
    %1163 = vmatpush2.msra.mxu0 0.0
    %1164 = vmatprep.subr.mxu0 0.0
    %1165 = vmatpush2.msra.mxu0 0.0
    %1166 = vmatprep.subr.mxu0 0.0
    %1167 = vmatpush2.msra.mxu0 0.0
    %1168 = vmatprep.subr.mxu0 0.0
    %1169 = vmatpush2.msra.mxu0 0.0
    %1170 = vmatprep.mubr.f32.mxu0 0.0
    %1171 = vmatmul.mubr.f32.gmra.mxu0 %v1104
    %v1172 = vpop.f32.mrf.mxu0
    %v1173 = vadd.f32 0.0, %v1172
    %v1174 = vpop.f32.mrf.mxu0
    %1175 = vdwg.mxu0
    %v1176 = vrcp.pop %v1099
    %v1177 = vmul.f32 1.0, %v1176
    %v1178 = vmul.f32 %v1173, %v1177
    %1180 = vrot.lane.b32.xlu0 %v1178, 8
    %v1181 = vpop.permute.xlu0 %1180
    %1183 = vst.msk [vmem:[#allocation2 + $0x8] sm:$0xff] %vm493, %v1181
    %1184 = vrot.lane.b32.xlu0 %v144, 112
    %v1185 = vpop.permute.xlu0 %1184
    %1186 = vrot.lane.b32.xlu0 %v144, 80
    %v1187 = vpop.permute.xlu0 %1186
    %v1188 = vsel %vm155, %v1185, 0
    %v1190 = vsel %vm155, %v1187, 0
    %1192 = vmatprep.subr.mxu0 0.0
    %1193 = vmatpush1.xpose.msra.mxu0 0.0
    %1194 = vmatprep.subr.mxu0 0.0
    %1195 = vmatpush1.xpose.msra.mxu0 0.0
    %1196 = vmatprep.subr.mxu0 0.0
    %1197 = vmatpush1.xpose.msra.mxu0 0.0
    %1198 = vmatprep.subr.mxu0 0.0
    %1199 = vmatpush1.xpose.msra.mxu0 0.0
    %1200 = vmatprep.subr.mxu0 0.0
    %1201 = vmatpush1.xpose.msra.mxu0 0.0
    %1202 = vmatprep.subr.mxu0 0.0
    %1203 = vmatpush1.xpose.msra.mxu0 0.0
    %1204 = vmatprep.subr.mxu0 0.0
    %1205 = vmatpush1.xpose.msra.mxu0 0.0
    %1206 = vmatprep.subr.mxu0 0.0
    %1207 = vmatpush1.xpose.msra.mxu0 0.0
    %1208 = vmatprep.subr.mxu0 0.0
    %1209 = vmatpush1.xpose.msra.mxu0 0.0
    %1210 = vmatprep.subr.mxu0 0.0
    %1211 = vmatpush1.xpose.msra.mxu0 0.0
    %1212 = vmatprep.subr.mxu0 0.0
    %1213 = vmatpush1.xpose.msra.mxu0 0.0
    %1214 = vmatprep.subr.mxu0 0.0
    %1215 = vmatpush1.xpose.msra.mxu0 0.0
    %1216 = vmatprep.subr.mxu0 0.0
    %1217 = vmatpush1.xpose.msra.mxu0 0.0
    %1218 = vmatprep.subr.mxu0 0.0
    %1219 = vmatpush1.xpose.msra.mxu0 0.0
    %1220 = vmatprep.subr.mxu0 0.0
    %1221 = vmatpush1.xpose.msra.mxu0 0.0
    %1222 = vmatprep.subr.mxu0 0.0
    %1223 = vmatpush1.xpose.msra.mxu0 %v1190
    %1224 = vmatprep.subr.mxu0 0.0
    %1225 = vmatpush2.xpose.msra.mxu0 0.0
    %1226 = vmatprep.subr.mxu0 0.0
    %1227 = vmatpush2.xpose.msra.mxu0 0.0
    %1228 = vmatprep.subr.mxu0 0.0
    %1229 = vmatpush2.xpose.msra.mxu0 0.0
    %1230 = vmatprep.subr.mxu0 0.0
    %1231 = vmatpush2.xpose.msra.mxu0 0.0
    %1232 = vmatprep.subr.mxu0 0.0
    %1233 = vmatpush2.xpose.msra.mxu0 0.0
    %1234 = vmatprep.subr.mxu0 0.0
    %1235 = vmatpush2.xpose.msra.mxu0 0.0
    %1236 = vmatprep.subr.mxu0 0.0
    %1237 = vmatpush2.xpose.msra.mxu0 0.0
    %1238 = vmatprep.subr.mxu0 0.0
    %1239 = vmatpush2.xpose.msra.mxu0 0.0
    %1240 = vmatprep.subr.mxu0 0.0
    %1241 = vmatpush2.xpose.msra.mxu0 0.0
    %1242 = vmatprep.subr.mxu0 0.0
    %1243 = vmatpush2.xpose.msra.mxu0 0.0
    %1244 = vmatprep.subr.mxu0 0.0
    %1245 = vmatpush2.xpose.msra.mxu0 0.0
    %1246 = vmatprep.subr.mxu0 0.0
    %1247 = vmatpush2.xpose.msra.mxu0 0.0
    %1248 = vmatprep.subr.mxu0 0.0
    %1249 = vmatpush2.xpose.msra.mxu0 0.0
    %1250 = vmatprep.subr.mxu0 0.0
    %1251 = vmatpush2.xpose.msra.mxu0 0.0
    %1252 = vmatprep.subr.mxu0 0.0
    %1253 = vmatpush2.xpose.msra.mxu0 0.0
    %1254 = vmatprep.subr.mxu0 0.0
    %1255 = vmatpush2.xpose.msra.mxu0 0.0
    %1256 = vmatprep.mubr.f32.mxu0 0.0
    %1257 = vmatmul.mubr.f32.gmra.mxu0 %v1188
    %v1258 = vpop.f32.mrf.mxu0
    %v1259 = vadd.f32 0.0, %v1258
    %v1260 = vpop.f32.mrf.mxu0
    %1261 = vdwg.mxu0
    %v1262 = vmul.f32 %v1259, 0.35355338
    %v1263 = vsel %vm151, %v1262, -inf
    %v1264 = vsel %vm155, %v1263, -inf
    %1265 = vmax.xlane.f32.xlu0 %v1264
    %v1266 = vpop.xlane.xlu0 %1265
    %v1267 = vsub.f32 %v1263, %v1266
    %v1268 = vmul.f32 %v1267, 1.442695
    %v1269 = vpow.pop %v1268
    %v1270 = vsel %vm155, %v1269, 0.0
    %1271 = vadd.xlane.f32.xlu0 %v1270
    %v1272 = vpop.xlane.xlu0 %1271
    %1273 = vrot.lane.b32.xlu0 %v144, 48
    %v1274 = vpop.permute.xlu0 %1273
    %v1277 = vsel %vm155, %v1269, 0
    %1279 = vmatprep.subr.mxu0 0.0
    %1280 = vmatpush1.msra.mxu0 0.0
    %1281 = vmatprep.subr.mxu0 0.0
    %1282 = vmatpush1.msra.mxu0 0.0
    %1283 = vmatprep.subr.mxu0 0.0
    %1284 = vmatpush1.msra.mxu0 0.0
    %1285 = vmatprep.subr.mxu0 0.0
    %1286 = vmatpush1.msra.mxu0 0.0
    %1287 = vmatprep.subr.mxu0 0.0
    %1288 = vmatpush1.msra.mxu0 0.0
    %1289 = vmatprep.subr.mxu0 0.0
    %1290 = vmatpush1.msra.mxu0 0.0
    %1291 = vmatprep.subr.mxu0 0.0
    %1292 = vmatpush1.msra.mxu0 0.0
    %1293 = vmatprep.subr.mxu0 0.0
    %1294 = vmatpush1.msra.mxu0 0.0
    %1295 = vmatprep.subr.mxu0 0.0
    %1296 = vmatpush1.msra.mxu0 0.0
    %1297 = vmatprep.subr.mxu0 0.0
    %1298 = vmatpush1.msra.mxu0 0.0
    %1299 = vmatprep.subr.mxu0 0.0
    %1300 = vmatpush1.msra.mxu0 0.0
    %1301 = vmatprep.subr.mxu0 0.0
    %1302 = vmatpush1.msra.mxu0 0.0
    %1303 = vmatprep.subr.mxu0 0.0
    %1304 = vmatpush1.msra.mxu0 0.0
    %1305 = vmatprep.subr.mxu0 0.0
    %1306 = vmatpush1.msra.mxu0 0.0
    %1307 = vmatprep.subr.mxu0 0.0
    %1308 = vmatpush1.msra.mxu0 0.0
    %1309 = vmatprep.subr.mxu0 0.0
    %1310 = vmatpush1.msra.mxu0 %v1274
    %1311 = vmatprep.subr.mxu0 0.0
    %1312 = vmatpush2.msra.mxu0 0.0
    %1313 = vmatprep.subr.mxu0 0.0
    %1314 = vmatpush2.msra.mxu0 0.0
    %1315 = vmatprep.subr.mxu0 0.0
    %1316 = vmatpush2.msra.mxu0 0.0
    %1317 = vmatprep.subr.mxu0 0.0
    %1318 = vmatpush2.msra.mxu0 0.0
    %1319 = vmatprep.subr.mxu0 0.0
    %1320 = vmatpush2.msra.mxu0 0.0
    %1321 = vmatprep.subr.mxu0 0.0
    %1322 = vmatpush2.msra.mxu0 0.0
    %1323 = vmatprep.subr.mxu0 0.0
    %1324 = vmatpush2.msra.mxu0 0.0
    %1325 = vmatprep.subr.mxu0 0.0
    %1326 = vmatpush2.msra.mxu0 0.0
    %1327 = vmatprep.subr.mxu0 0.0
    %1328 = vmatpush2.msra.mxu0 0.0
    %1329 = vmatprep.subr.mxu0 0.0
    %1330 = vmatpush2.msra.mxu0 0.0
    %1331 = vmatprep.subr.mxu0 0.0
    %1332 = vmatpush2.msra.mxu0 0.0
    %1333 = vmatprep.subr.mxu0 0.0
    %1334 = vmatpush2.msra.mxu0 0.0
    %1335 = vmatprep.subr.mxu0 0.0
    %1336 = vmatpush2.msra.mxu0 0.0
    %1337 = vmatprep.subr.mxu0 0.0
    %1338 = vmatpush2.msra.mxu0 0.0
    %1339 = vmatprep.subr.mxu0 0.0
    %1340 = vmatpush2.msra.mxu0 0.0
    %1341 = vmatprep.subr.mxu0 0.0
    %1342 = vmatpush2.msra.mxu0 0.0
    %1343 = vmatprep.mubr.f32.mxu0 0.0
    %1344 = vmatmul.mubr.f32.gmra.mxu0 %v1277
    %v1345 = vpop.f32.mrf.mxu0
    %v1346 = vadd.f32 0.0, %v1345
    %v1347 = vpop.f32.mrf.mxu0
    %1348 = vdwg.mxu0
    %v1349 = vrcp.pop %v1272
    %v1350 = vmul.f32 1.0, %v1349
    %v1351 = vmul.f32 %v1346, %v1350
    %1353 = vrot.lane.b32.xlu0 %v1351, 16
    %v1354 = vpop.permute.xlu0 %1353
    %1356 = vst.msk [vmem:[#allocation2 + $0x8] sm:$0xff] %vm667, %v1354
    %1357 = vrot.lane.b32.xlu0 %v144, 104
    %v1358 = vpop.permute.xlu0 %1357
    %1359 = vrot.lane.b32.xlu0 %v144, 72
    %v1360 = vpop.permute.xlu0 %1359
    %v1361 = vsel %vm155, %v1358, 0
    %v1363 = vsel %vm155, %v1360, 0
    %1365 = vmatprep.subr.mxu0 0.0
    %1366 = vmatpush1.xpose.msra.mxu0 0.0
    %1367 = vmatprep.subr.mxu0 0.0
    %1368 = vmatpush1.xpose.msra.mxu0 0.0
    %1369 = vmatprep.subr.mxu0 0.0
    %1370 = vmatpush1.xpose.msra.mxu0 0.0
    %1371 = vmatprep.subr.mxu0 0.0
    %1372 = vmatpush1.xpose.msra.mxu0 0.0
    %1373 = vmatprep.subr.mxu0 0.0
    %1374 = vmatpush1.xpose.msra.mxu0 0.0
    %1375 = vmatprep.subr.mxu0 0.0
    %1376 = vmatpush1.xpose.msra.mxu0 0.0
    %1377 = vmatprep.subr.mxu0 0.0
    %1378 = vmatpush1.xpose.msra.mxu0 0.0
    %1379 = vmatprep.subr.mxu0 0.0
    %1380 = vmatpush1.xpose.msra.mxu0 0.0
    %1381 = vmatprep.subr.mxu0 0.0
    %1382 = vmatpush1.xpose.msra.mxu0 0.0
    %1383 = vmatprep.subr.mxu0 0.0
    %1384 = vmatpush1.xpose.msra.mxu0 0.0
    %1385 = vmatprep.subr.mxu0 0.0
    %1386 = vmatpush1.xpose.msra.mxu0 0.0
    %1387 = vmatprep.subr.mxu0 0.0
    %1388 = vmatpush1.xpose.msra.mxu0 0.0
    %1389 = vmatprep.subr.mxu0 0.0
    %1390 = vmatpush1.xpose.msra.mxu0 0.0
    %1391 = vmatprep.subr.mxu0 0.0
    %1392 = vmatpush1.xpose.msra.mxu0 0.0
    %1393 = vmatprep.subr.mxu0 0.0
    %1394 = vmatpush1.xpose.msra.mxu0 0.0
    %1395 = vmatprep.subr.mxu0 0.0
    %1396 = vmatpush1.xpose.msra.mxu0 %v1363
    %1397 = vmatprep.subr.mxu0 0.0
    %1398 = vmatpush2.xpose.msra.mxu0 0.0
    %1399 = vmatprep.subr.mxu0 0.0
    %1400 = vmatpush2.xpose.msra.mxu0 0.0
    %1401 = vmatprep.subr.mxu0 0.0
    %1402 = vmatpush2.xpose.msra.mxu0 0.0
    %1403 = vmatprep.subr.mxu0 0.0
    %1404 = vmatpush2.xpose.msra.mxu0 0.0
    %1405 = vmatprep.subr.mxu0 0.0
    %1406 = vmatpush2.xpose.msra.mxu0 0.0
    %1407 = vmatprep.subr.mxu0 0.0
    %1408 = vmatpush2.xpose.msra.mxu0 0.0
    %1409 = vmatprep.subr.mxu0 0.0
    %1410 = vmatpush2.xpose.msra.mxu0 0.0
    %1411 = vmatprep.subr.mxu0 0.0
    %1412 = vmatpush2.xpose.msra.mxu0 0.0
    %1413 = vmatprep.subr.mxu0 0.0
    %1414 = vmatpush2.xpose.msra.mxu0 0.0
    %1415 = vmatprep.subr.mxu0 0.0
    %1416 = vmatpush2.xpose.msra.mxu0 0.0
    %1417 = vmatprep.subr.mxu0 0.0
    %1418 = vmatpush2.xpose.msra.mxu0 0.0
    %1419 = vmatprep.subr.mxu0 0.0
    %1420 = vmatpush2.xpose.msra.mxu0 0.0
    %1421 = vmatprep.subr.mxu0 0.0
    %1422 = vmatpush2.xpose.msra.mxu0 0.0
    %1423 = vmatprep.subr.mxu0 0.0
    %1424 = vmatpush2.xpose.msra.mxu0 0.0
    %1425 = vmatprep.subr.mxu0 0.0
    %1426 = vmatpush2.xpose.msra.mxu0 0.0
    %1427 = vmatprep.subr.mxu0 0.0
    %1428 = vmatpush2.xpose.msra.mxu0 0.0
    %1429 = vmatprep.mubr.f32.mxu0 0.0
    %1430 = vmatmul.mubr.f32.gmra.mxu0 %v1361
    %v1431 = vpop.f32.mrf.mxu0
    %v1432 = vadd.f32 0.0, %v1431
    %v1433 = vpop.f32.mrf.mxu0
    %1434 = vdwg.mxu0
    %v1435 = vmul.f32 %v1432, 0.35355338
    %v1436 = vsel %vm151, %v1435, -inf
    %v1437 = vsel %vm155, %v1436, -inf
    %1438 = vmax.xlane.f32.xlu0 %v1437
    %v1439 = vpop.xlane.xlu0 %1438
    %v1440 = vsub.f32 %v1436, %v1439
    %v1441 = vmul.f32 %v1440, 1.442695
    %v1442 = vpow.pop %v1441
    %v1443 = vsel %vm155, %v1442, 0.0
    %1444 = vadd.xlane.f32.xlu0 %v1443
    %v1445 = vpop.xlane.xlu0 %1444
    %1446 = vrot.lane.b32.xlu0 %v144, 40
    %v1447 = vpop.permute.xlu0 %1446
    %v1450 = vsel %vm155, %v1442, 0
    %1452 = vmatprep.subr.mxu0 0.0
    %1453 = vmatpush1.msra.mxu0 0.0
    %1454 = vmatprep.subr.mxu0 0.0
    %1455 = vmatpush1.msra.mxu0 0.0
    %1456 = vmatprep.subr.mxu0 0.0
    %1457 = vmatpush1.msra.mxu0 0.0
    %1458 = vmatprep.subr.mxu0 0.0
    %1459 = vmatpush1.msra.mxu0 0.0
    %1460 = vmatprep.subr.mxu0 0.0
    %1461 = vmatpush1.msra.mxu0 0.0
    %1462 = vmatprep.subr.mxu0 0.0
    %1463 = vmatpush1.msra.mxu0 0.0
    %1464 = vmatprep.subr.mxu0 0.0
    %1465 = vmatpush1.msra.mxu0 0.0
    %1466 = vmatprep.subr.mxu0 0.0
    %1467 = vmatpush1.msra.mxu0 0.0
    %1468 = vmatprep.subr.mxu0 0.0
    %1469 = vmatpush1.msra.mxu0 0.0
    %1470 = vmatprep.subr.mxu0 0.0
    %1471 = vmatpush1.msra.mxu0 0.0
    %1472 = vmatprep.subr.mxu0 0.0
    %1473 = vmatpush1.msra.mxu0 0.0
    %1474 = vmatprep.subr.mxu0 0.0
    %1475 = vmatpush1.msra.mxu0 0.0
    %1476 = vmatprep.subr.mxu0 0.0
    %1477 = vmatpush1.msra.mxu0 0.0
    %1478 = vmatprep.subr.mxu0 0.0
    %1479 = vmatpush1.msra.mxu0 0.0
    %1480 = vmatprep.subr.mxu0 0.0
    %1481 = vmatpush1.msra.mxu0 0.0
    %1482 = vmatprep.subr.mxu0 0.0
    %1483 = vmatpush1.msra.mxu0 %v1447
    %1484 = vmatprep.subr.mxu0 0.0
    %1485 = vmatpush2.msra.mxu0 0.0
    %1486 = vmatprep.subr.mxu0 0.0
    %1487 = vmatpush2.msra.mxu0 0.0
    %1488 = vmatprep.subr.mxu0 0.0
    %1489 = vmatpush2.msra.mxu0 0.0
    %1490 = vmatprep.subr.mxu0 0.0
    %1491 = vmatpush2.msra.mxu0 0.0
    %1492 = vmatprep.subr.mxu0 0.0
    %1493 = vmatpush2.msra.mxu0 0.0
    %1494 = vmatprep.subr.mxu0 0.0
    %1495 = vmatpush2.msra.mxu0 0.0
    %1496 = vmatprep.subr.mxu0 0.0
    %1497 = vmatpush2.msra.mxu0 0.0
    %1498 = vmatprep.subr.mxu0 0.0
    %1499 = vmatpush2.msra.mxu0 0.0
    %1500 = vmatprep.subr.mxu0 0.0
    %1501 = vmatpush2.msra.mxu0 0.0
    %1502 = vmatprep.subr.mxu0 0.0
    %1503 = vmatpush2.msra.mxu0 0.0
    %1504 = vmatprep.subr.mxu0 0.0
    %1505 = vmatpush2.msra.mxu0 0.0
    %1506 = vmatprep.subr.mxu0 0.0
    %1507 = vmatpush2.msra.mxu0 0.0
    %1508 = vmatprep.subr.mxu0 0.0
    %1509 = vmatpush2.msra.mxu0 0.0
    %1510 = vmatprep.subr.mxu0 0.0
    %1511 = vmatpush2.msra.mxu0 0.0
    %1512 = vmatprep.subr.mxu0 0.0
    %1513 = vmatpush2.msra.mxu0 0.0
    %1514 = vmatprep.subr.mxu0 0.0
    %1515 = vmatpush2.msra.mxu0 0.0
    %1516 = vmatprep.mubr.f32.mxu0 0.0
    %1517 = vmatmul.mubr.f32.gmra.mxu0 %v1450
    %v1518 = vpop.f32.mrf.mxu0
    %v1519 = vadd.f32 0.0, %v1518
    %v1520 = vpop.f32.mrf.mxu0
    %1521 = vdwg.mxu0
    %v1522 = vrcp.pop %v1445
    %v1523 = vmul.f32 1.0, %v1522
    %v1524 = vmul.f32 %v1519, %v1523
    %1526 = vrot.lane.b32.xlu0 %v1524, 24
    %v1527 = vpop.permute.xlu0 %1526
    %1529 = vst.msk [vmem:[#allocation2 + $0x8] sm:$0xff] %vm841, %v1527
    %v1530 = vld [vmem:[#allocation2] sm:$0xff]
    %v1531 = vld [vmem:[#allocation2 + $0x8] sm:$0xff]
    %v1532 = vld [vmem:[%s2] sm:$0xff]
    %v1533 = vld [vmem:[%s2 + $0x8] sm:$0xff]
    %v1534 = vld [vmem:[%s2 + $0x10] sm:$0xff]
    %v1535 = vld [vmem:[%s2 + $0x18] sm:$0xff]
    %v1537 = vsel %vm29, %v1530, 0
    %v1540 = vsel %vm29, %v1531, 0
    %v1543 = vsel %vm29, %v1532, 0
    %v1546 = vsel %vm29, %v1533, 0
    %v1549 = vsel %vm29, %v1534, 0
    %v1552 = vsel %vm29, %v1535, 0
    %1554 = vmatprep.subr.mxu0 0.0
    %1555 = vmatpush1.xpose.msra.mxu0 0.0
    %1556 = vmatprep.subr.mxu0 0.0
    %1557 = vmatpush1.xpose.msra.mxu0 0.0
    %1558 = vmatprep.subr.mxu0 0.0
    %1559 = vmatpush1.xpose.msra.mxu0 0.0
    %1560 = vmatprep.subr.mxu0 0.0
    %1561 = vmatpush1.xpose.msra.mxu0 0.0
    %1562 = vmatprep.subr.mxu0 0.0
    %1563 = vmatpush1.xpose.msra.mxu0 0.0
    %1564 = vmatprep.subr.mxu0 0.0
    %1565 = vmatpush1.xpose.msra.mxu0 0.0
    %1566 = vmatprep.subr.mxu0 0.0
    %1567 = vmatpush1.xpose.msra.mxu0 0.0
    %1568 = vmatprep.subr.mxu0 0.0
    %1569 = vmatpush1.xpose.msra.mxu0 0.0
    %1570 = vmatprep.subr.mxu0 0.0
    %1571 = vmatpush1.xpose.msra.mxu0 0.0
    %1572 = vmatprep.subr.mxu0 0.0
    %1573 = vmatpush1.xpose.msra.mxu0 0.0
    %1574 = vmatprep.subr.mxu0 0.0
    %1575 = vmatpush1.xpose.msra.mxu0 0.0
    %1576 = vmatprep.subr.mxu0 0.0
    %1577 = vmatpush1.xpose.msra.mxu0 0.0
    %1578 = vmatprep.subr.mxu0 0.0
    %1579 = vmatpush1.xpose.msra.mxu0 %v1552
    %1580 = vmatprep.subr.mxu0 0.0
    %1581 = vmatpush1.xpose.msra.mxu0 %v1549
    %1582 = vmatprep.subr.mxu0 0.0
    %1583 = vmatpush1.xpose.msra.mxu0 %v1546
    %1584 = vmatprep.subr.mxu0 0.0
    %1585 = vmatpush1.xpose.msra.mxu0 %v1543
    %1586 = vmatprep.subr.mxu0 0.0
    %1587 = vmatpush2.xpose.msra.mxu0 0.0
    %1588 = vmatprep.subr.mxu0 0.0
    %1589 = vmatpush2.xpose.msra.mxu0 0.0
    %1590 = vmatprep.subr.mxu0 0.0
    %1591 = vmatpush2.xpose.msra.mxu0 0.0
    %1592 = vmatprep.subr.mxu0 0.0
    %1593 = vmatpush2.xpose.msra.mxu0 0.0
    %1594 = vmatprep.subr.mxu0 0.0
    %1595 = vmatpush2.xpose.msra.mxu0 0.0
    %1596 = vmatprep.subr.mxu0 0.0
    %1597 = vmatpush2.xpose.msra.mxu0 0.0
    %1598 = vmatprep.subr.mxu0 0.0
    %1599 = vmatpush2.xpose.msra.mxu0 0.0
    %1600 = vmatprep.subr.mxu0 0.0
    %1601 = vmatpush2.xpose.msra.mxu0 0.0
    %1602 = vmatprep.subr.mxu0 0.0
    %1603 = vmatpush2.xpose.msra.mxu0 0.0
    %1604 = vmatprep.subr.mxu0 0.0
    %1605 = vmatpush2.xpose.msra.mxu0 0.0
    %1606 = vmatprep.subr.mxu0 0.0
    %1607 = vmatpush2.xpose.msra.mxu0 0.0
    %1608 = vmatprep.subr.mxu0 0.0
    %1609 = vmatpush2.xpose.msra.mxu0 0.0
    %1610 = vmatprep.subr.mxu0 0.0
    %1611 = vmatpush2.xpose.msra.mxu0 0.0
    %1612 = vmatprep.subr.mxu0 0.0
    %1613 = vmatpush2.xpose.msra.mxu0 0.0
    %1614 = vmatprep.subr.mxu0 0.0
    %1615 = vmatpush2.xpose.msra.mxu0 0.0
    %1616 = vmatprep.subr.mxu0 0.0
    %1617 = vmatpush2.xpose.msra.mxu0 0.0
    %1618 = vmatprep.mubr.f32.mxu0 0.0
    %1619 = vmatmul.mubr.f32.gmra.mxu0 %v1537
    %v1620 = vpop.f32.mrf.mxu0
    %v1621 = vadd.f32 0.0, %v1620
    %v1622 = vpop.f32.mrf.mxu0
    %1623 = vmatprep.mubr.f32.mxu0 0.0
    %1624 = vmatmul.mubr.f32.gmra.mxu0 %v1540
    %v1625 = vpop.f32.mrf.mxu0
    %v1626 = vadd.f32 0.0, %v1625
    %v1627 = vpop.f32.mrf.mxu0
    %1628 = vdwg.mxu0
    %1629 = vst.msk [vmem:[#allocation3] sm:$0xff] %vm29, %v1621
    %1630 = vst.msk [vmem:[#allocation3 + $0x8] sm:$0xff] %vm29, %v1626
    // Predicated region
    $region14: #{hf_wrapper_forward.1} parent=1 // pred_check
      _
    $region15: #{hf_wrapper_forward.1} parent=1 // pred_check_branch
      %1632 = sbr.rel (0) target = $region17
    $region16: #{hf_wrapper_forward.1} parent=1 // pred_region
      %s1634 = ssub.s32 256, 256
      %1635 = vsyncadd [#allocation4], %s1634
      %s1636 = sshll.u32 [#allocation3], 4
      %s1637 = int_to_ptr.vmem [resolvable:$true] %s1636
      %1642 = dma.vmem_to_hbm [thread:$0]  %s1637, 256, %s3, [#allocation4], 128, 128, 8
    $region17: #{hf_wrapper_forward.1} parent=1 // pred_fallthru
      _
    // Predicated region
    $region18: #{hf_wrapper_forward.1} parent=1 // pred_check
      _
    $region19: #{hf_wrapper_forward.1} parent=1 // pred_check_branch
      %1644 = sbr.rel (0) target = $region21
    $region20: #{hf_wrapper_forward.1} parent=1 // pred_region
      %1645 = dma.done [#allocation4], 256
    $region21: #{hf_wrapper_forward.1} parent=1 // pred_fallthru
      _
    %1646 = vsyncpa [#allocation4], 1

</llo_original>
